<compile_context>
chip_gen: v7x
topology: tpu7x:2x2x1
jax: 0.10.0
libtpu: 0.0.40
codegen_flags: <defaults>
</compile_context>

<pallas_src>
import functools

import jax
import jax.numpy as jnp
from jax.experimental import pallas as pl
from jax.experimental.pallas import tpu as pltpu

FEAT_C = 2048        # backbone output channels (EfficientNet-B5 head width)
HIDDEN = 256         # fc1 output
NUM_CLASSES = 11     # fc2 output
OUT_PAD = 128        # lane-dense padded fc2 output width
DROPOUT_RATE = 0.0   # Dropout(p=0.0) == identity

_BLOCK_CAP_BYTES = 8 * 1024 * 1024   # per streamed feature block (bf16 bytes)
_VMEM_LIMIT = 48 * 1024 * 1024       # <= v7x 64 MiB physical VMEM


def _detector_head_kernel(x_ref, w1_ref, b1_ref, w2_ref, b2_ref, o_ref,
                          h_acc_ref, *, inv_hw, c_tile, sum_axis):
    # x_ref : (B_t, C_t, HW) bf16 [HW on lanes]   if sum_axis == 2
    #         (B_t, HW, C_t) bf16 [C  on lanes]   if sum_axis == 1
    # w1_ref: (2048, 256) bf16  — full fc1 weight, VMEM-resident
    # b1_ref: (1, 256) f32 ; w2_ref: (256, 128) f32 ; b2_ref: (1, 128) f32
    # o_ref : (B_t, 1, 128) f32 — lane-dense padded logits
    # h_acc_ref: (B_t, 256) f32 — fc1 accumulator over channel tiles
    c = pl.program_id(1)

    @pl.when(c == 0)
    def _():
        h_acc_ref[...] = jnp.zeros_like(h_acc_ref)

    # Spatial partial sum over this channel slice; bf16 inputs, f32 accumulate.
    part = jnp.sum(x_ref[...], axis=sum_axis, dtype=jnp.float32)  # (B_t, C_t)

    # Partial fc1 contribution (MXU bf16, f32 accumulation).  w1 stays
    # resident in VMEM; slice the rows matching this channel tile.
    c0 = pl.multiple_of(c * c_tile, c_tile)
    w1_slice = w1_ref[pl.ds(c0, c_tile), :]
    h_acc_ref[...] += jnp.dot(part.astype(jnp.bfloat16), w1_slice,
                              preferred_element_type=jnp.float32)

    @pl.when(c == pl.num_programs(1) - 1)
    def _():
        # mean = sum / HW, applied exactly once; Dropout(p=0.0) is identity.
        h = h_acc_ref[...] * inv_hw + b1_ref[...]
        out = jnp.dot(h, w2_ref[...],
                      preferred_element_type=jnp.float32) + b2_ref[...]
        o_ref[:, 0, :] = out.astype(o_ref.dtype)


def detector_head(feature_nchw, w1, b1, w2, b2):
    """feature_nchw: (B, 2048, H, W) — backbone feature map (NCHW)."""
    B, C, H, W = feature_nchw.shape
    assert C == FEAT_C
    HW = H * W

    # bf16 for the dominant HBM streams; tiny params stay f32.
    feat_bf16 = feature_nchw.astype(jnp.bfloat16)
    w1_bf16 = w1.astype(jnp.bfloat16)
    b1_2d = b1.reshape(1, HIDDEN).astype(jnp.float32)
    # Pad fc2 params to 128 output lanes (zeros) -> unmasked lane-dense stores.
    w2_p = jnp.zeros((HIDDEN, OUT_PAD), jnp.float32).at[:, :NUM_CLASSES].set(
        w2.astype(jnp.float32))
    b2_p = jnp.zeros((1, OUT_PAD), jnp.float32).at[0, :NUM_CLASSES].set(
        b2.astype(jnp.float32))

    # >= 2 batch blocks whenever B >= 2 so both v7x TensorCores get work
    # (harmless on single-TC v5e/v6e).
    b_tile = max(1, min(8, pl.cdiv(B, 2)))

    spatial_on_lanes = HW >= 128
    if spatial_on_lanes:
        # Free reshape of contiguous NCHW — no transpose, no extra HBM pass.
        x_in = feat_bf16.reshape(B, C, HW)
        hw_pad = ((HW + 127) // 128) * 128     # lane padding in VMEM
        sum_axis = 2
    else:
        # Small spatial map: channels on lanes (cheap transpose of a small
        # tensor) -> dense lanes, no tiny DMA rows, no 8x vreg waste.
        x_in = jnp.transpose(feat_bf16.reshape(B, C, HW), (0, 2, 1))
        hw_pad = ((HW + 15) // 16) * 16        # bf16 sublane packing
        sum_axis = 1

    # Channel tile: biggest power-of-two divisor of 2048 keeping one streamed
    # feature block <= ~8 MiB (double-buffered by the BlockSpec pipeline).
    c_tile = FEAT_C
    while c_tile > 256 and b_tile * c_tile * hw_pad * 2 > _BLOCK_CAP_BYTES:
        c_tile //= 2
    while b_tile > 1 and b_tile * c_tile * hw_pad * 2 > _BLOCK_CAP_BYTES:
        b_tile //= 2
    n_b = pl.cdiv(B, b_tile)
    n_c = C // c_tile

    if spatial_on_lanes:
        x_spec = pl.BlockSpec((b_tile, c_tile, HW), lambda b, c: (b, c, 0))
    else:
        x_spec = pl.BlockSpec((b_tile, HW, c_tile), lambda b, c: (b, 0, c))

    kernel = functools.partial(_detector_head_kernel, inv_hw=1.0 / HW,
                               c_tile=c_tile, sum_axis=sum_axis)

    cost = pl.CostEstimate(
        flops=B * C * HW + 2 * B * C * HIDDEN + 2 * B * HIDDEN * OUT_PAD,
        transcendentals=0,
        bytes_accessed=(B * C * HW * 2 + C * HIDDEN * 2
                        + HIDDEN * OUT_PAD * 4 + B * OUT_PAD * 4),
    )

    out_padded = pl.pallas_call(
        kernel,
        out_shape=jax.ShapeDtypeStruct((B, 1, OUT_PAD), jnp.float32),
        grid=(n_b, n_c),
        in_specs=[
            x_spec,
            # fc1 weight: full block, constant index map -> fetched once,
            # resident in VMEM for the whole kernel.
            pl.BlockSpec((FEAT_C, HIDDEN), lambda b, c: (0, 0)),
            pl.BlockSpec((1, HIDDEN), lambda b, c: (0, 0)),
            pl.BlockSpec((HIDDEN, OUT_PAD), lambda b, c: (0, 0)),
            pl.BlockSpec((1, OUT_PAD), lambda b, c: (0, 0)),
        ],
        out_specs=pl.BlockSpec((b_tile, 1, OUT_PAD), lambda b, c: (b, 0, 0)),
        scratch_shapes=[pltpu.VMEM((b_tile, HIDDEN), jnp.float32)],
        compiler_params=pltpu.CompilerParams(
            dimension_semantics=("parallel", "arbitrary"),
            vmem_limit_bytes=_VMEM_LIMIT),
        cost_estimate=cost,
    )(x_in, w1_bf16, b1_2d, w2_p, b2_p)

    return out_padded[:, 0, :NUM_CLASSES]


def _reference(feature_nchw, w1, b1, w2, b2):
    feat = jnp.mean(feature_nchw, axis=(2, 3))        # (B, 2048)
    h = feat @ w1 + b1
    return h @ w2 + b2


if __name__ == "__main__":
    key = jax.random.PRNGKey(0)
    k_feat, k_w1, k_b1, k_w2, k_b2 = jax.random.split(key, 5)

    # Small shapes: batch=2, backbone feature map 2048 x 4 x 4 (NCHW).
    B, H, W = 2, 4, 4
    feature = jax.random.normal(k_feat, (B, FEAT_C, H, W), dtype=jnp.float32)

    # Deterministic synthetic parameters (nn.Linear shapes, stored transposed
    # as (in, out) so the kernel does x @ W).
    w1 = (jax.random.normal(k_w1, (FEAT_C, HIDDEN), dtype=jnp.float32)
          * (1.0 / jnp.sqrt(FEAT_C)))
    b1 = jax.random.normal(k_b1, (HIDDEN,), dtype=jnp.float32) * 0.1
    w2 = (jax.random.normal(k_w2, (HIDDEN, NUM_CLASSES), dtype=jnp.float32)
          * (1.0 / jnp.sqrt(HIDDEN)))
    b2 = jax.random.normal(k_b2, (NUM_CLASSES,), dtype=jnp.float32) * 0.1

    out = detector_head(feature, w1, b1, w2, b2)
    out = jax.block_until_ready(out)

    ref = _reference(feature, w1, b1, w2, b2)
    assert out.shape == (B, NUM_CLASSES), out.shape
    max_err = jnp.max(jnp.abs(out - ref))
    # bf16 streaming of x/w1 -> tolerance loosened accordingly.
    assert jnp.allclose(out, ref, atol=2e-2, rtol=2e-2), (
        f"max abs err = {max_err}")

    print("KERNEL_OK")
</pallas_src>

<mosaic_0001>
module attributes {stable_mosaic.version = 11 : i64} {
  func.func @_detector_head_kernel(%arg0: i32, %arg1: i32, %arg2: memref<1x16x2048xbf16, #tpu.memory_space<vmem>>, %arg3: memref<2048x256xbf16, #tpu.memory_space<vmem>>, %arg4: memref<1x256xf32, #tpu.memory_space<vmem>>, %arg5: memref<256x128xf32, #tpu.memory_space<vmem>>, %arg6: memref<1x128xf32, #tpu.memory_space<vmem>>, %arg7: memref<1x1x128xf32, #tpu.memory_space<vmem>>, %arg8: memref<1x256xf32, #tpu.memory_space<vmem>>) attributes {dimension_semantics = [#tpu.dimension_semantics<parallel>, #tpu.dimension_semantics<arbitrary>], iteration_bounds = array<i64: 2, 1>, scalar_prefetch = 0 : i64, scratch_operands = 1 : i64, tpu.core_type = #tpu.core_type<tc>, window_params = [{transform_indices = @transform_0, window_bounds = array<i64: 1, 16, 2048>}, {pipeline_mode = #tpu.pipeline_mode<synchronous>, transform_indices = @transform_1, window_bounds = array<i64: 2048, 256>}, {pipeline_mode = #tpu.pipeline_mode<synchronous>, transform_indices = @transform_2, window_bounds = array<i64: 1, 256>}, {pipeline_mode = #tpu.pipeline_mode<synchronous>, transform_indices = @transform_3, window_bounds = array<i64: 256, 128>}, {pipeline_mode = #tpu.pipeline_mode<synchronous>, transform_indices = @transform_4, window_bounds = array<i64: 1, 128>}, {transform_indices = @transform_5, window_bounds = array<i64: 1, 1, 128>}]} {
    %c0_i32 = arith.constant 0 : i32
    %0 = arith.cmpi eq, %arg1, %c0_i32 : i32
    %1 = arith.extui %0 : i1 to i32
    %c0_i32_0 = arith.constant 0 : i32
    %2 = arith.cmpi ne, %1, %c0_i32_0 : i32
    scf.if %2 {
      %cst_11 = arith.constant 0.000000e+00 : f32
      %18 = vector.broadcast %cst_11 : f32 to vector<1x256xf32>
      %c0_12 = arith.constant 0 : index
      %c0_13 = arith.constant 0 : index
      %19 = vector.load %arg8[%c0_12, %c0_13] : memref<1x256xf32, #tpu.memory_space<vmem>>, vector<1x256xf32>
      tpu.vector_store %arg8[%c0_12, %c0_13], %18 {strides = array<i32>} : memref<1x256xf32, #tpu.memory_space<vmem>>, vector<1x256xf32>,
    } else {
    }
    %c0 = arith.constant 0 : index
    %c0_1 = arith.constant 0 : index
    %c0_2 = arith.constant 0 : index
    %3 = vector.load %arg2[%c0, %c0_1, %c0_2] : memref<1x16x2048xbf16, #tpu.memory_space<vmem>>, vector<1x16x2048xbf16>
    %4 = arith.extf %3 : vector<1x16x2048xbf16> to vector<1x16x2048xf32>
    %cst = arith.constant dense<0.000000e+00> : vector<1x2048xf32>
    %5 = vector.multi_reduction <add>, %4, %cst [1] : vector<1x16x2048xf32> to vector<1x2048xf32>
    %c2048_i32 = arith.constant 2048 : i32
    %6 = arith.muli %arg1, %c2048_i32 : i32
    %7 = tpu.assume_multiple %6, 2048 : i32
    %8 = arith.index_cast %7 : i32 to index
    %c0_3 = arith.constant 0 : index
    %9 = vector.load %arg3[%8, %c0_3] : memref<2048x256xbf16, #tpu.memory_space<vmem>>, vector<2048x256xbf16>
    %c0_4 = arith.constant 0 : index
    %c0_5 = arith.constant 0 : index
    %10 = vector.load %arg8[%c0_4, %c0_5] : memref<1x256xf32, #tpu.memory_space<vmem>>, vector<1x256xf32>
    %11 = arith.truncf %5 : vector<1x2048xf32> to vector<1x2048xbf16>
    %cst_6 = arith.constant dense<0.000000e+00> : vector<1x256xf32>
    %12 = tpu.matmul %11, %9, %cst_6 {dimension_numbers = #tpu.dot_dimension_numbers<[1], [0], [0], [1], [0, 0, 1, 1], [], []>} : vector<1x2048xbf16>, vector<2048x256xbf16>, vector<1x256xf32> -> vector<1x256xf32>
    %13 = arith.addf %10, %12 : vector<1x256xf32>
    %c0_7 = arith.constant 0 : index
    %c0_8 = arith.constant 0 : index
    %14 = vector.load %arg8[%c0_7, %c0_8] : memref<1x256xf32, #tpu.memory_space<vmem>>, vector<1x256xf32>
    tpu.vector_store %arg8[%c0_7, %c0_8], %13 {strides = array<i32>} : memref<1x256xf32, #tpu.memory_space<vmem>>, vector<1x256xf32>,
    %c0_i32_9 = arith.constant 0 : i32
    %15 = arith.cmpi eq, %arg1, %c0_i32_9 : i32
    %16 = arith.extui %15 : i1 to i32
    %c0_i32_10 = arith.constant 0 : i32
    %17 = arith.cmpi ne, %16, %c0_i32_10 : i32
    scf.if %17 {
      %c0_11 = arith.constant 0 : index
      %c0_12 = arith.constant 0 : index
      %18 = vector.load %arg8[%c0_11, %c0_12] : memref<1x256xf32, #tpu.memory_space<vmem>>, vector<1x256xf32>
      %cst_13 = arith.constant 6.250000e-02 : f32
      %19 = vector.broadcast %cst_13 : f32 to vector<1x256xf32>
      %20 = arith.mulf %18, %19 : vector<1x256xf32>
      %c0_14 = arith.constant 0 : index
      %c0_15 = arith.constant 0 : index
      %21 = vector.load %arg4[%c0_14, %c0_15] : memref<1x256xf32, #tpu.memory_space<vmem>>, vector<1x256xf32>
      %22 = arith.addf %20, %21 : vector<1x256xf32>
      %c0_16 = arith.constant 0 : index
      %c0_17 = arith.constant 0 : index
      %23 = vector.load %arg5[%c0_16, %c0_17] : memref<256x128xf32, #tpu.memory_space<vmem>>, vector<256x128xf32>
      %cst_18 = arith.constant dense<0.000000e+00> : vector<1x128xf32>
      %24 = tpu.matmul %22, %23, %cst_18 {dimension_numbers = #tpu.dot_dimension_numbers<[1], [0], [0], [1], [0, 0, 1, 1], [], []>} : vector<1x256xf32>, vector<256x128xf32>, vector<1x128xf32> -> vector<1x128xf32>
      %c0_19 = arith.constant 0 : index
      %c0_20 = arith.constant 0 : index
      %25 = vector.load %arg6[%c0_19, %c0_20] : memref<1x128xf32, #tpu.memory_space<vmem>>, vector<1x128xf32>
      %26 = arith.addf %24, %25 : vector<1x128xf32>
      %c0_21 = arith.constant 0 : index
      %c0_22 = arith.constant 0 : index
      %c0_23 = arith.constant 0 : index
      %27 = vector.load %arg7[%c0_21, %c0_22, %c0_23] : memref<1x1x128xf32, #tpu.memory_space<vmem>>, vector<1x1x128xf32>
      %28 = vector.shape_cast %27 : vector<1x1x128xf32> to vector<1x128xf32>
      %29 = vector.shape_cast %26 : vector<1x128xf32> to vector<1x1x128xf32>
      tpu.vector_store %arg7[%c0_21, %c0_22, %c0_23], %29 {strides = array<i32>} : memref<1x1x128xf32, #tpu.memory_space<vmem>>, vector<1x1x128xf32>,
    } else {
    }
    return
  }
  func.func @transform_0(%arg0: i32, %arg1: i32) -> (i32, i32, i32) {
    %c0_i32 = arith.constant 0 : i32
    %c0_i32_0 = arith.constant 0 : i32
    return %arg0, %c0_i32, %arg1 : i32, i32, i32
  }
  func.func @transform_1(%arg0: i32, %arg1: i32) -> (i32, i32) {
    %c0_i32 = arith.constant 0 : i32
    %c0_i32_0 = arith.constant 0 : i32
    %c0_i32_1 = arith.constant 0 : i32
    return %c0_i32, %c0_i32_0 : i32, i32
  }
  func.func @transform_2(%arg0: i32, %arg1: i32) -> (i32, i32) {
    %c0_i32 = arith.constant 0 : i32
    %c0_i32_0 = arith.constant 0 : i32
    %c0_i32_1 = arith.constant 0 : i32
    return %c0_i32, %c0_i32_0 : i32, i32
  }
  func.func @transform_3(%arg0: i32, %arg1: i32) -> (i32, i32) {
    %c0_i32 = arith.constant 0 : i32
    %c0_i32_0 = arith.constant 0 : i32
    %c0_i32_1 = arith.constant 0 : i32
    return %c0_i32, %c0_i32_0 : i32, i32
  }
  func.func @transform_4(%arg0: i32, %arg1: i32) -> (i32, i32) {
    %c0_i32 = arith.constant 0 : i32
    %c0_i32_0 = arith.constant 0 : i32
    %c0_i32_1 = arith.constant 0 : i32
    return %c0_i32, %c0_i32_0 : i32, i32
  }
  func.func @transform_5(%arg0: i32, %arg1: i32) -> (i32, i32, i32) {
    %c0_i32 = arith.constant 0 : i32
    %c0_i32_0 = arith.constant 0 : i32
    %c0_i32_1 = arith.constant 0 : i32
    return %arg0, %c0_i32, %c0_i32_0 : i32, i32, i32
  }
}

</mosaic_0001>

<llo_original>
// kernel: tpu_custom_call.1
$region0: #{tpu_custom_call.1}
  #allocation0 [shape = 'u32[]', space=smem, size = 0x4, offset = 0x4, fixed_abs, tag = 'smem constant byte address 0x4 - core index']
  #allocation1 [shape = 'u32[144,128]{1,0:T(1,128)}', space=vmem, size = 0x12000, scoped, tag = 'internal scratch']
  #allocation2 [shape = 'f32[1,256]{1,0:T(1,128)}', space=vmem, size = 0x400, scoped, tag = 'scratch operand']
  %s0 = inlined_call_operand.hbm [shape: bf16[2,16,2048], index: 0, kind: input, shape index: {}]
  %s1 = inlined_call_operand.hbm [shape: bf16[2048,256], index: 1, kind: input, shape index: {}]
  %s2 = inlined_call_operand.vmem [shape: f32[1,256], index: 2, kind: input, shape index: {}]
  %s3 = inlined_call_operand.hbm [shape: f32[256,128], index: 3, kind: input, shape index: {}]
  %s4 = inlined_call_operand.vmem [shape: f32[1,128], index: 4, kind: input, shape index: {}]
  %s5 = inlined_call_operand.hbm [shape: f32[2,1,128], index: 5, kind: output, shape index: {}]
  %s6 = sld [smem:[#allocation0]]
  $region73: #{tpu_custom_call.1} parent=0
    _
  %s8 = ssub.s32 1, %s6
  %s9 = scalar_select 0, %s8, %s6
  $region1: #{tpu_custom_call.1} parent=0
    #allocation3 [shape = 'u8[131072]{0}', space=vmem, size = 0x20000, scoped, tag = 'input window, operand 0']
    #allocation4 [shape = 's32[2]{0}', space=sflag, size = 0x8, scoped, tag = 'scoped memory for tpu_custom_call.1']
    #allocation5 [shape = 's32[2]{0}', space=sflag, size = 0x8, scoped, tag = 'scoped memory for tpu_custom_call.1']
    #allocation6 [shape = 'u8[1048576]{0}', space=vmem, size = 0x100000, scoped, tag = 'input window, operand 1, single buffered']
    #allocation7 [shape = 's32[1]{0}', space=sflag, size = 0x4, scoped, tag = 'scoped memory for tpu_custom_call.1']
    #allocation8 [shape = 'u8[131072]{0}', space=vmem, size = 0x20000, scoped, tag = 'input window, operand 3, single buffered']
    #allocation9 [shape = 'u8[1024]{0}', space=vmem, size = 0x400, scoped, tag = 'output window, operand 0']
    %10 = vsyncpa [#allocation4], 0
    %s11 = scalar_lea.sflag [#allocation4], 1
    %12 = vsyncpa %s11, 0
    %13 = vsyncpa [#allocation7], 0
    %14 = vsyncpa [#allocation5], 0
    %s15 = scalar_lea.sflag [#allocation5], 1
    %16 = vsyncpa %s15, 0
    loop: start=0, step=1, limit=4
    $region2: #{tpu_custom_call.1} parent=1 // loop_pre_header
      _
    $region3: #{tpu_custom_call.1} parent=1 // loop_header
      %s18 = sphi 0, %s22
      %p19 = scmp.ge.s32.totalorder %s18, 4
      %s25 = sphi 0, %s37
      %s26 = sphi 0, %s33
      %s27 = sphi 0, %s25
      %s28 = sphi 0, %s26
      %s29 = sphi 0, %s27
      %s30 = sphi 0, %s28
      %s42 = sphi 0, %s44
      %s45 = sphi 0, %s42
      %s46 = sphi 0, %s45
      %s62 = sphi 0, %s46
      %s66 = sphi 0, %s66
      %s68 = sphi 0, %s66
      %s69 = sphi 0, %s68
      %s83 = sphi 0, %s69
      %s87 = sphi 0, %s87
      %s89 = sphi 0, %s87
      %s90 = sphi 0, %s89
      %s104 = sphi 0, %s90
      %s108 = sphi 0, %s108
      %s110 = sphi 0, %s108
      %s111 = sphi 0, %s110
      %s125 = sphi 0, %s111
      %s129 = sphi 0, %s129
      %s131 = sphi 0, %s129
      %s132 = sphi 0, %s131
      %s146 = sphi 0, %s132
      %s152 = sphi 0, %s154
      %s155 = sphi 0, %s152
      %s156 = sphi 0, %s155
      %s172 = sphi 0, %s156
    $region4: #{tpu_custom_call.1} parent=1 // loop_header_branch
      %21 = sbr.rel (%p19) target = $region8
    $region5: #{tpu_custom_call.1} parent=1 // loop_body
      %s23 = ssub.s32 %s18, 1
      %s24 = ssub.s32 %s18, 2
      %s31 = sadd.s32 1, %s26
      %p32 = scmp.ge.s32.totalorder %s31, 1
      %s33 = scalar_select %p32, 0, %s31
      %s34 = sadd.s32 1, %s25
      %s35 = scalar_select %p32, %s34, %s25
      %p36 = scmp.ge.s32.totalorder %s35, 2
      %s37 = scalar_select %p36, 0, %s35
      %s38 = ssub.s32 %s25, %s37
      %s39 = ssub.s32 %s26, %s33
      %s40 = sor.u32 %s38, %s39
      %p41 = scmp.eq.s32.totalorder %s40, 0
      %s43 = sadd.s32 %s42, 1
      %s44 = scalar_select %p41, %s42, %s43
      %p47 = pneg %p41
      %p48 = scmp.eq.s32.totalorder %s18, 1
      %p49 = por %p47, %p48
      %p50 = scmp.ne.s32.totalorder %s42, %s45
      %p51 = scmp.eq.s32.totalorder %s18, 0
      %p52 = por %p50, %p51
      %p53 = scmp.ne.s32.totalorder %s42, %s45
      %p54 = scmp.eq.s32.totalorder %s23, 1
      %p55 = por %p53, %p54
      %p56 = scmp.ne.s32.totalorder %s45, %s46
      %p57 = scmp.eq.s32.totalorder %s23, 0
      %p58 = por %p56, %p57
      %p59 = scmp.ne.s32.totalorder %s45, %s46
      %p60 = scmp.eq.s32.totalorder %s24, 1
      %p61 = por %p59, %p60
      %p63 = scmp.ne.s32.totalorder %s46, %s62
      %p64 = scmp.eq.s32.totalorder %s24, 0
      %p65 = por %p63, %p64
      %s67 = sadd.s32 %s66, 1
      %p70 = scmp.eq.s32.totalorder %s18, 1
      %p71 = scmp.ne.s32.totalorder %s66, %s68
      %p72 = scmp.eq.s32.totalorder %s18, 0
      %p73 = por %p71, %p72
      %p74 = scmp.ne.s32.totalorder %s66, %s68
      %p75 = scmp.eq.s32.totalorder %s23, 1
      %p76 = por %p74, %p75
      %p77 = scmp.ne.s32.totalorder %s68, %s69
      %p78 = scmp.eq.s32.totalorder %s23, 0
      %p79 = por %p77, %p78
      %p80 = scmp.ne.s32.totalorder %s68, %s69
      %p81 = scmp.eq.s32.totalorder %s24, 1
      %p82 = por %p80, %p81
      %p84 = scmp.ne.s32.totalorder %s69, %s83
      %p85 = scmp.eq.s32.totalorder %s24, 0
      %p86 = por %p84, %p85
      %s88 = sadd.s32 %s87, 1
      %p91 = scmp.eq.s32.totalorder %s18, 1
      %p92 = scmp.ne.s32.totalorder %s87, %s89
      %p93 = scmp.eq.s32.totalorder %s18, 0
      %p94 = por %p92, %p93
      %p95 = scmp.ne.s32.totalorder %s87, %s89
      %p96 = scmp.eq.s32.totalorder %s23, 1
      %p97 = por %p95, %p96
      %p98 = scmp.ne.s32.totalorder %s89, %s90
      %p99 = scmp.eq.s32.totalorder %s23, 0
      %p100 = por %p98, %p99
      %p101 = scmp.ne.s32.totalorder %s89, %s90
      %p102 = scmp.eq.s32.totalorder %s24, 1
      %p103 = por %p101, %p102
      %p105 = scmp.ne.s32.totalorder %s90, %s104
      %p106 = scmp.eq.s32.totalorder %s24, 0
      %p107 = por %p105, %p106
      %s109 = sadd.s32 %s108, 1
      %p112 = scmp.eq.s32.totalorder %s18, 1
      %p113 = scmp.ne.s32.totalorder %s108, %s110
      %p114 = scmp.eq.s32.totalorder %s18, 0
      %p115 = por %p113, %p114
      %p116 = scmp.ne.s32.totalorder %s108, %s110
      %p117 = scmp.eq.s32.totalorder %s23, 1
      %p118 = por %p116, %p117
      %p119 = scmp.ne.s32.totalorder %s110, %s111
      %p120 = scmp.eq.s32.totalorder %s23, 0
      %p121 = por %p119, %p120
      %p122 = scmp.ne.s32.totalorder %s110, %s111
      %p123 = scmp.eq.s32.totalorder %s24, 1
      %p124 = por %p122, %p123
      %p126 = scmp.ne.s32.totalorder %s111, %s125
      %p127 = scmp.eq.s32.totalorder %s24, 0
      %p128 = por %p126, %p127
      %s130 = sadd.s32 %s129, 1
      %p133 = scmp.eq.s32.totalorder %s18, 1
      %p134 = scmp.ne.s32.totalorder %s129, %s131
      %p135 = scmp.eq.s32.totalorder %s18, 0
      %p136 = por %p134, %p135
      %p137 = scmp.ne.s32.totalorder %s129, %s131
      %p138 = scmp.eq.s32.totalorder %s23, 1
      %p139 = por %p137, %p138
      %p140 = scmp.ne.s32.totalorder %s131, %s132
      %p141 = scmp.eq.s32.totalorder %s23, 0
      %p142 = por %p140, %p141
      %p143 = scmp.ne.s32.totalorder %s131, %s132
      %p144 = scmp.eq.s32.totalorder %s24, 1
      %p145 = por %p143, %p144
      %p147 = scmp.ne.s32.totalorder %s132, %s146
      %p148 = scmp.eq.s32.totalorder %s24, 0
      %p149 = por %p147, %p148
      %s150 = ssub.s32 %s25, %s37
      %p151 = scmp.eq.s32.totalorder %s150, 0
      %s153 = sadd.s32 %s152, 1
      %s154 = scalar_select %p151, %s152, %s153
      %p157 = pneg %p151
      %p158 = scmp.eq.s32.totalorder %s18, 1
      %p159 = por %p157, %p158
      %p160 = scmp.ne.s32.totalorder %s152, %s155
      %p161 = scmp.eq.s32.totalorder %s18, 0
      %p162 = por %p160, %p161
      %p163 = scmp.ne.s32.totalorder %s152, %s155
      %p164 = scmp.eq.s32.totalorder %s23, 1
      %p165 = por %p163, %p164
      %p166 = scmp.ne.s32.totalorder %s155, %s156
      %p167 = scmp.eq.s32.totalorder %s23, 0
      %p168 = por %p166, %p167
      %p169 = scmp.ne.s32.totalorder %s155, %s156
      %p170 = scmp.eq.s32.totalorder %s24, 1
      %p171 = por %p169, %p170
      %p173 = scmp.ne.s32.totalorder %s156, %s172
      %p174 = scmp.eq.s32.totalorder %s24, 0
      %p175 = por %p173, %p174
      %p176 = scmp.le.s32.totalorder 1, %s18
      %p177 = scmp.lt.s32.totalorder %s18, 3
      %p178 = pnand %p176, %p177
      %p179 = pneg %p178
      // Predicated region
      $region9: #{tpu_custom_call.1} parent=5 // pred_check
        _
      $region10: #{tpu_custom_call.1} parent=5 // pred_check_branch
        %181 = sbr.rel (%p178) target = $region12
      $region11: #{tpu_custom_call.1} parent=5 // pred_region
        %s182 = ssub.s32 %s18, 1
        // Predicated region
        $region13: #{tpu_custom_call.1} parent=11 // pred_check
          %p183 = pneg %p79
        $region14: #{tpu_custom_call.1} parent=11 // pred_check_branch
          %185 = sbr.rel (%p183) target = $region16
        $region15: #{tpu_custom_call.1} parent=11 // pred_region
          %s187 = ssub.s32 32768, 32768
          %188 = vsyncadd [#allocation7], %s187
          %s189 = sshll.u32 [#allocation6], 4
          %s190 = int_to_ptr.vmem [resolvable:$true] %s189
          %195 = dma.hbm_to_vmem [thread:$0]  %s1, 32768, %s190, [#allocation7], 128, 128, 8
        $region16: #{tpu_custom_call.1} parent=11 // pred_fallthru
          _
        // Predicated region
        $region17: #{tpu_custom_call.1} parent=11 // pred_check
          %p196 = pneg %p100
        $region18: #{tpu_custom_call.1} parent=11 // pred_check_branch
          %198 = sbr.rel (%p196) target = $region20
        $region19: #{tpu_custom_call.1} parent=11 // pred_region
          _
        $region20: #{tpu_custom_call.1} parent=11 // pred_fallthru
          _
        // Predicated region
        $region21: #{tpu_custom_call.1} parent=11 // pred_check
          %p199 = pneg %p121
        $region22: #{tpu_custom_call.1} parent=11 // pred_check_branch
          %201 = sbr.rel (%p199) target = $region24
        $region23: #{tpu_custom_call.1} parent=11 // pred_region
          %s203 = ssub.s32 4096, 4096
          %204 = vsyncadd [#allocation7], %s203
          %s205 = sshll.u32 [#allocation8], 4
          %s206 = int_to_ptr.vmem [resolvable:$true] %s205
          %211 = dma.hbm_to_vmem [thread:$0]  %s3, 4096, %s206, [#allocation7], 128, 128, 8
        $region24: #{tpu_custom_call.1} parent=11 // pred_fallthru
          _
        // Predicated region
        $region25: #{tpu_custom_call.1} parent=11 // pred_check
          %p212 = pneg %p142
        $region26: #{tpu_custom_call.1} parent=11 // pred_check_branch
          %214 = sbr.rel (%p212) target = $region28
        $region27: #{tpu_custom_call.1} parent=11 // pred_region
          _
        $region28: #{tpu_custom_call.1} parent=11 // pred_fallthru
          _
      $region12: #{tpu_custom_call.1} parent=5 // pred_fallthru
        _
      %p215 = scmp.lt.s32.totalorder %s18, 2
      // Predicated region
      $region29: #{tpu_custom_call.1} parent=5 // pred_check
        %p216 = pneg %p215
      $region30: #{tpu_custom_call.1} parent=5 // pred_check_branch
        %218 = sbr.rel (%p216) target = $region32
      $region31: #{tpu_custom_call.1} parent=5 // pred_region
        // Predicated region
        $region33: #{tpu_custom_call.1} parent=31 // pred_check
          %p219 = pneg %p52
        $region34: #{tpu_custom_call.1} parent=31 // pred_check_branch
          %221 = sbr.rel (%p219) target = $region36
        $region35: #{tpu_custom_call.1} parent=31 // pred_region
          %s222 = sand.u32 %s42, 1
          %s223 = scalar_lea.sflag [#allocation4], %s222
          %s224 = sand.u32 %s42, 1
          %s225 = smul.addr %s224, 128
          %s226 = scalar_lea.vmem [#allocation3], %s225
          %s227 = smul.u32 16, %s26
          %s229 = ssub.s32 2048, 2048
          %230 = vsyncadd %s223, %s229
          %s231 = smul.addr %s25, 32
          %s232 = sadd.s32 %s227, %s231
          %s233 = smul.addr %s232, 64
          %s234 = scalar_lea.hbm %s0, %s233
          %s235 = sshll.u32 %s226, 4
          %s236 = int_to_ptr.vmem [resolvable:$true] %s235
          %241 = dma.hbm_to_vmem [thread:$0]  %s234, 2048, %s236, %s223, 1024, 1024, 64
        $region36: #{tpu_custom_call.1} parent=31 // pred_fallthru
          _
      $region32: #{tpu_custom_call.1} parent=5 // pred_fallthru
        _
      %p242 = scmp.le.s32.totalorder 1, %s18
      %p243 = scmp.lt.s32.totalorder %s18, 3
      %p244 = pnand %p242, %p243
      %p245 = pneg %p244
      // Predicated region
      $region37: #{tpu_custom_call.1} parent=5 // pred_check
        _
      $region38: #{tpu_custom_call.1} parent=5 // pred_check_branch
        %247 = sbr.rel (%p244) target = $region40
      $region39: #{tpu_custom_call.1} parent=5 // pred_region
        %s248 = ssub.s32 %s18, 1
        %s249 = sand.u32 %s45, 1
        %s250 = scalar_lea.sflag [#allocation4], %s249
        %s251 = sand.u32 %s45, 1
        %s252 = smul.addr %s251, 128
        %s253 = scalar_lea.vmem [#allocation3], %s252
        // Predicated region
        $region41: #{tpu_custom_call.1} parent=39 // pred_check
          %p254 = pneg %p58
        $region42: #{tpu_custom_call.1} parent=39 // pred_check_branch
          %256 = sbr.rel (%p254) target = $region44
        $region43: #{tpu_custom_call.1} parent=39 // pred_region
          %257 = dma.done %s250, 2048
        $region44: #{tpu_custom_call.1} parent=39 // pred_fallthru
          _
        // Predicated region
        $region45: #{tpu_custom_call.1} parent=39 // pred_check
          %p258 = pneg %p79
        $region46: #{tpu_custom_call.1} parent=39 // pred_check_branch
          %260 = sbr.rel (%p258) target = $region48
        $region47: #{tpu_custom_call.1} parent=39 // pred_region
          %261 = dma.done [#allocation7], 32768
        $region48: #{tpu_custom_call.1} parent=39 // pred_fallthru
          _
        // Predicated region
        $region49: #{tpu_custom_call.1} parent=39 // pred_check
          %p262 = pneg %p121
        $region50: #{tpu_custom_call.1} parent=39 // pred_check_branch
          %264 = sbr.rel (%p262) target = $region52
        $region51: #{tpu_custom_call.1} parent=39 // pred_region
          %265 = dma.done [#allocation7], 4096
        $region52: #{tpu_custom_call.1} parent=39 // pred_fallthru
          _
        %s266 = sand.u32 %s45, 1
        %s267 = scalar_lea.sflag [#allocation4], %s266
        %s268 = sand.u32 %s45, 1
        %s269 = smul.addr %s268, 128
        %s270 = scalar_lea.vmem [#allocation3], %s269
        %p271 = pneg %p58
        %p272 = pneg %p55
        %p273 = pneg %p79
        %p274 = pneg %p76
        %p275 = pneg %p100
        %p276 = pneg %p97
        %p277 = pneg %p121
        %p278 = pneg %p118
        %p279 = pneg %p142
        %p280 = pneg %p139
        %p281 = pneg %p168
        %p282 = pneg %p165
        %s283 = sand.u32 %s155, 1
        %s284 = scalar_lea.sflag [#allocation5], %s283
        %s285 = sand.u32 %s155, 1
        %s286 = scalar_lea.vmem [#allocation9], %s285
        %s287 = smul.u32 16, %s28
        %p288 = scmp.eq.s32.totalorder %s28, 0
        // Predicated region
        $region53: #{tpu_custom_call.1} parent=39 // pred_check
          %p289 = pneg %p288
        $region54: #{tpu_custom_call.1} parent=39 // pred_check_branch
          %291 = sbr.rel (%p289) target = $region56
        $region55: #{tpu_custom_call.1} parent=39 // pred_region
          %v292 = vlaneseq
          %vm293 = vcmp.ge.s32.totalorder %v292, 0
          %vm294 = vcmp.lt.s32.totalorder %v292, 256
          %vm295 = vmand %vm293, %vm294
          %296 = vst.msk [vmem:[#allocation2] sm:$0x3] %vm295, 0.0
        $region56: #{tpu_custom_call.1} parent=39 // pred_fallthru
          _
        %v297 = vld [vmem:[%s253] sm:$0xff]
        %v298 = vld [vmem:[%s253 + $0x8] sm:$0xff]
        %v299 = vld [vmem:[%s253 + $0x10] sm:$0xff]
        %v300 = vld [vmem:[%s253 + $0x18] sm:$0xff]
        %v301 = vld [vmem:[%s253 + $0x20] sm:$0xff]
        %v302 = vld [vmem:[%s253 + $0x28] sm:$0xff]
        %v303 = vld [vmem:[%s253 + $0x30] sm:$0xff]
        %v304 = vld [vmem:[%s253 + $0x38] sm:$0xff]
        %v305 = vld [vmem:[%s253 + $0x40] sm:$0xff]
        %v306 = vld [vmem:[%s253 + $0x48] sm:$0xff]
        %v307 = vld [vmem:[%s253 + $0x50] sm:$0xff]
        %v308 = vld [vmem:[%s253 + $0x58] sm:$0xff]
        %v309 = vld [vmem:[%s253 + $0x60] sm:$0xff]
        %v310 = vld [vmem:[%s253 + $0x68] sm:$0xff]
        %v311 = vld [vmem:[%s253 + $0x70] sm:$0xff]
        %v312 = vld [vmem:[%s253 + $0x78] sm:$0xff]
        %v313 = vunpack.c.l.bf16 %v297
        %v314 = vunpack.c.h.bf16 %v297
        %v315 = vunpack.c.l.bf16 %v298
        %v316 = vunpack.c.h.bf16 %v298
        %v317 = vunpack.c.l.bf16 %v299
        %v318 = vunpack.c.h.bf16 %v299
        %v319 = vunpack.c.l.bf16 %v300
        %v320 = vunpack.c.h.bf16 %v300
        %v321 = vunpack.c.l.bf16 %v301
        %v322 = vunpack.c.h.bf16 %v301
        %v323 = vunpack.c.l.bf16 %v302
        %v324 = vunpack.c.h.bf16 %v302
        %v325 = vunpack.c.l.bf16 %v303
        %v326 = vunpack.c.h.bf16 %v303
        %v327 = vunpack.c.l.bf16 %v304
        %v328 = vunpack.c.h.bf16 %v304
        %v329 = vunpack.c.l.bf16 %v305
        %v330 = vunpack.c.h.bf16 %v305
        %v331 = vunpack.c.l.bf16 %v306
        %v332 = vunpack.c.h.bf16 %v306
        %v333 = vunpack.c.l.bf16 %v307
        %v334 = vunpack.c.h.bf16 %v307
        %v335 = vunpack.c.l.bf16 %v308
        %v336 = vunpack.c.h.bf16 %v308
        %v337 = vunpack.c.l.bf16 %v309
        %v338 = vunpack.c.h.bf16 %v309
        %v339 = vunpack.c.l.bf16 %v310
        %v340 = vunpack.c.h.bf16 %v310
        %v341 = vunpack.c.l.bf16 %v311
        %v342 = vunpack.c.h.bf16 %v311
        %v343 = vunpack.c.l.bf16 %v312
        %v344 = vunpack.c.h.bf16 %v312
        %v345 = vadd.f32 %v313, %v329
        %v346 = vrot.slane %v345, 4
        %v347 = vadd.f32 %v345, %v346
        %v348 = vrot.slane %v347, 2
        %v349 = vadd.f32 %v347, %v348
        %v350 = vrot.slane %v349, 1
        %v351 = vadd.f32 %v349, %v350
        %v352 = vadd.f32 %v314, %v330
        %v353 = vrot.slane %v352, 4
        %v354 = vadd.f32 %v352, %v353
        %v355 = vrot.slane %v354, 2
        %v356 = vadd.f32 %v354, %v355
        %v357 = vrot.slane %v356, 1
        %v358 = vadd.f32 %v356, %v357
        %v359 = vadd.f32 %v315, %v331
        %v360 = vrot.slane %v359, 4
        %v361 = vadd.f32 %v359, %v360
        %v362 = vrot.slane %v361, 2
        %v363 = vadd.f32 %v361, %v362
        %v364 = vrot.slane %v363, 1
        %v365 = vadd.f32 %v363, %v364
        %v366 = vadd.f32 %v316, %v332
        %v367 = vrot.slane %v366, 4
        %v368 = vadd.f32 %v366, %v367
        %v369 = vrot.slane %v368, 2
        %v370 = vadd.f32 %v368, %v369
        %v371 = vrot.slane %v370, 1
        %v372 = vadd.f32 %v370, %v371
        %v373 = vadd.f32 %v317, %v333
        %v374 = vrot.slane %v373, 4
        %v375 = vadd.f32 %v373, %v374
        %v376 = vrot.slane %v375, 2
        %v377 = vadd.f32 %v375, %v376
        %v378 = vrot.slane %v377, 1
        %v379 = vadd.f32 %v377, %v378
        %v380 = vadd.f32 %v318, %v334
        %v381 = vrot.slane %v380, 4
        %v382 = vadd.f32 %v380, %v381
        %v383 = vrot.slane %v382, 2
        %v384 = vadd.f32 %v382, %v383
        %v385 = vrot.slane %v384, 1
        %v386 = vadd.f32 %v384, %v385
        %v387 = vadd.f32 %v319, %v335
        %v388 = vrot.slane %v387, 4
        %v389 = vadd.f32 %v387, %v388
        %v390 = vrot.slane %v389, 2
        %v391 = vadd.f32 %v389, %v390
        %v392 = vrot.slane %v391, 1
        %v393 = vadd.f32 %v391, %v392
        %v394 = vadd.f32 %v320, %v336
        %v395 = vrot.slane %v394, 4
        %v396 = vadd.f32 %v394, %v395
        %v397 = vrot.slane %v396, 2
        %v398 = vadd.f32 %v396, %v397
        %v399 = vrot.slane %v398, 1
        %v400 = vadd.f32 %v398, %v399
        %v401 = vadd.f32 %v321, %v337
        %v402 = vrot.slane %v401, 4
        %v403 = vadd.f32 %v401, %v402
        %v404 = vrot.slane %v403, 2
        %v405 = vadd.f32 %v403, %v404
        %v406 = vrot.slane %v405, 1
        %v407 = vadd.f32 %v405, %v406
        %v408 = vadd.f32 %v322, %v338
        %v409 = vrot.slane %v408, 4
        %v410 = vadd.f32 %v408, %v409
        %v411 = vrot.slane %v410, 2
        %v412 = vadd.f32 %v410, %v411
        %v413 = vrot.slane %v412, 1
        %v414 = vadd.f32 %v412, %v413
        %v415 = vadd.f32 %v323, %v339
        %v416 = vrot.slane %v415, 4
        %v417 = vadd.f32 %v415, %v416
        %v418 = vrot.slane %v417, 2
        %v419 = vadd.f32 %v417, %v418
        %v420 = vrot.slane %v419, 1
        %v421 = vadd.f32 %v419, %v420
        %v422 = vadd.f32 %v324, %v340
        %v423 = vrot.slane %v422, 4
        %v424 = vadd.f32 %v422, %v423
        %v425 = vrot.slane %v424, 2
        %v426 = vadd.f32 %v424, %v425
        %v427 = vrot.slane %v426, 1
        %v428 = vadd.f32 %v426, %v427
        %v429 = vadd.f32 %v325, %v341
        %v430 = vrot.slane %v429, 4
        %v431 = vadd.f32 %v429, %v430
        %v432 = vrot.slane %v431, 2
        %v433 = vadd.f32 %v431, %v432
        %v434 = vrot.slane %v433, 1
        %v435 = vadd.f32 %v433, %v434
        %v436 = vadd.f32 %v326, %v342
        %v437 = vrot.slane %v436, 4
        %v438 = vadd.f32 %v436, %v437
        %v439 = vrot.slane %v438, 2
        %v440 = vadd.f32 %v438, %v439
        %v441 = vrot.slane %v440, 1
        %v442 = vadd.f32 %v440, %v441
        %v443 = vadd.f32 %v327, %v343
        %v444 = vrot.slane %v443, 4
        %v445 = vadd.f32 %v443, %v444
        %v446 = vrot.slane %v445, 2
        %v447 = vadd.f32 %v445, %v446
        %v448 = vrot.slane %v447, 1
        %v449 = vadd.f32 %v447, %v448
        %v450 = vadd.f32 %v328, %v344
        %v451 = vrot.slane %v450, 4
        %v452 = vadd.f32 %v450, %v451
        %v453 = vrot.slane %v452, 2
        %v454 = vadd.f32 %v452, %v453
        %v455 = vrot.slane %v454, 1
        %v456 = vadd.f32 %v454, %v455
        %s457 = smul.u32 %s28, 2048
        %s458 = sshra.s32 %s457, 3
        %s459 = sand.u32 %s457, 7
        %s460 = smul.u32 %s458, 2
        %s461 = smul.addr %s460, 4
        %s462 = scalar_lea.vmem [#allocation6], %s461
        %v463 = vld [vmem:[%s462] sm:$0xff]
        %v464 = vld [vmem:[%s462 + $0x8] sm:$0xff]
        %v465 = vld [vmem:[%s462 + $0x10] sm:$0xff]
        %v466 = vld [vmem:[%s462 + $0x18] sm:$0xff]
        %v467 = vld [vmem:[%s462 + $0x20] sm:$0xff]
        %v468 = vld [vmem:[%s462 + $0x28] sm:$0xff]
        %v469 = vld [vmem:[%s462 + $0x30] sm:$0xff]
        %v470 = vld [vmem:[%s462 + $0x38] sm:$0xff]
        %v471 = vld [vmem:[%s462 + $0x40] sm:$0xff]
        %v472 = vld [vmem:[%s462 + $0x48] sm:$0xff]
        %v473 = vld [vmem:[%s462 + $0x50] sm:$0xff]
        %v474 = vld [vmem:[%s462 + $0x58] sm:$0xff]
        %v475 = vld [vmem:[%s462 + $0x60] sm:$0xff]
        %v476 = vld [vmem:[%s462 + $0x68] sm:$0xff]
        %v477 = vld [vmem:[%s462 + $0x70] sm:$0xff]
        %v478 = vld [vmem:[%s462 + $0x78] sm:$0xff]
        %v479 = vld [vmem:[%s462 + $0x80] sm:$0xff]
        %v480 = vld [vmem:[%s462 + $0x88] sm:$0xff]
        %v481 = vld [vmem:[%s462 + $0x90] sm:$0xff]
        %v482 = vld [vmem:[%s462 + $0x98] sm:$0xff]
        %v483 = vld [vmem:[%s462 + $0xa0] sm:$0xff]
        %v484 = vld [vmem:[%s462 + $0xa8] sm:$0xff]
        %v485 = vld [vmem:[%s462 + $0xb0] sm:$0xff]
        %v486 = vld [vmem:[%s462 + $0xb8] sm:$0xff]
        %v487 = vld [vmem:[%s462 + $0xc0] sm:$0xff]
        %v488 = vld [vmem:[%s462 + $0xc8] sm:$0xff]
        %v489 = vld [vmem:[%s462 + $0xd0] sm:$0xff]
        %v490 = vld [vmem:[%s462 + $0xd8] sm:$0xff]
        %v491 = vld [vmem:[%s462 + $0xe0] sm:$0xff]
        %v492 = vld [vmem:[%s462 + $0xe8] sm:$0xff]
        %v493 = vld [vmem:[%s462 + $0xf0] sm:$0xff]
        %v494 = vld [vmem:[%s462 + $0xf8] sm:$0xff]
        %v495 = vld [vmem:[%s462 + $0x100] sm:$0xff]
        %v496 = vld [vmem:[%s462 + $0x108] sm:$0xff]
        %v497 = vld [vmem:[%s462 + $0x110] sm:$0xff]
        %v498 = vld [vmem:[%s462 + $0x118] sm:$0xff]
        %v499 = vld [vmem:[%s462 + $0x120] sm:$0xff]
        %v500 = vld [vmem:[%s462 + $0x128] sm:$0xff]
        %v501 = vld [vmem:[%s462 + $0x130] sm:$0xff]
        %v502 = vld [vmem:[%s462 + $0x138] sm:$0xff]
        %v503 = vld [vmem:[%s462 + $0x140] sm:$0xff]
        %v504 = vld [vmem:[%s462 + $0x148] sm:$0xff]
        %v505 = vld [vmem:[%s462 + $0x150] sm:$0xff]
        %v506 = vld [vmem:[%s462 + $0x158] sm:$0xff]
        %v507 = vld [vmem:[%s462 + $0x160] sm:$0xff]
        %v508 = vld [vmem:[%s462 + $0x168] sm:$0xff]
        %v509 = vld [vmem:[%s462 + $0x170] sm:$0xff]
        %v510 = vld [vmem:[%s462 + $0x178] sm:$0xff]
        %v511 = vld [vmem:[%s462 + $0x180] sm:$0xff]
        %v512 = vld [vmem:[%s462 + $0x188] sm:$0xff]
        %v513 = vld [vmem:[%s462 + $0x190] sm:$0xff]
        %v514 = vld [vmem:[%s462 + $0x198] sm:$0xff]
        %v515 = vld [vmem:[%s462 + $0x1a0] sm:$0xff]
        %v516 = vld [vmem:[%s462 + $0x1a8] sm:$0xff]
        %v517 = vld [vmem:[%s462 + $0x1b0] sm:$0xff]
        %v518 = vld [vmem:[%s462 + $0x1b8] sm:$0xff]
        %v519 = vld [vmem:[%s462 + $0x1c0] sm:$0xff]
        %v520 = vld [vmem:[%s462 + $0x1c8] sm:$0xff]
        %v521 = vld [vmem:[%s462 + $0x1d0] sm:$0xff]
        %v522 = vld [vmem:[%s462 + $0x1d8] sm:$0xff]
        %v523 = vld [vmem:[%s462 + $0x1e0] sm:$0xff]
        %v524 = vld [vmem:[%s462 + $0x1e8] sm:$0xff]
        %v525 = vld [vmem:[%s462 + $0x1f0] sm:$0xff]
        %v526 = vld [vmem:[%s462 + $0x1f8] sm:$0xff]
        %v527 = vld [vmem:[%s462 + $0x200] sm:$0xff]
        %v528 = vld [vmem:[%s462 + $0x208] sm:$0xff]
        %v529 = vld [vmem:[%s462 + $0x210] sm:$0xff]
        %v530 = vld [vmem:[%s462 + $0x218] sm:$0xff]
        %v531 = vld [vmem:[%s462 + $0x220] sm:$0xff]
        %v532 = vld [vmem:[%s462 + $0x228] sm:$0xff]
        %v533 = vld [vmem:[%s462 + $0x230] sm:$0xff]
        %v534 = vld [vmem:[%s462 + $0x238] sm:$0xff]
        %v535 = vld [vmem:[%s462 + $0x240] sm:$0xff]
        %v536 = vld [vmem:[%s462 + $0x248] sm:$0xff]
        %v537 = vld [vmem:[%s462 + $0x250] sm:$0xff]
        %v538 = vld [vmem:[%s462 + $0x258] sm:$0xff]
        %v539 = vld [vmem:[%s462 + $0x260] sm:$0xff]
        %v540 = vld [vmem:[%s462 + $0x268] sm:$0xff]
        %v541 = vld [vmem:[%s462 + $0x270] sm:$0xff]
        %v542 = vld [vmem:[%s462 + $0x278] sm:$0xff]
        %v543 = vld [vmem:[%s462 + $0x280] sm:$0xff]
        %v544 = vld [vmem:[%s462 + $0x288] sm:$0xff]
        %v545 = vld [vmem:[%s462 + $0x290] sm:$0xff]
        %v546 = vld [vmem:[%s462 + $0x298] sm:$0xff]
        %v547 = vld [vmem:[%s462 + $0x2a0] sm:$0xff]
        %v548 = vld [vmem:[%s462 + $0x2a8] sm:$0xff]
        %v549 = vld [vmem:[%s462 + $0x2b0] sm:$0xff]
        %v550 = vld [vmem:[%s462 + $0x2b8] sm:$0xff]
        %v551 = vld [vmem:[%s462 + $0x2c0] sm:$0xff]
        %v552 = vld [vmem:[%s462 + $0x2c8] sm:$0xff]
        %v553 = vld [vmem:[%s462 + $0x2d0] sm:$0xff]
        %v554 = vld [vmem:[%s462 + $0x2d8] sm:$0xff]
        %v555 = vld [vmem:[%s462 + $0x2e0] sm:$0xff]
        %v556 = vld [vmem:[%s462 + $0x2e8] sm:$0xff]
        %v557 = vld [vmem:[%s462 + $0x2f0] sm:$0xff]
        %v558 = vld [vmem:[%s462 + $0x2f8] sm:$0xff]
        %v559 = vld [vmem:[%s462 + $0x300] sm:$0xff]
        %v560 = vld [vmem:[%s462 + $0x308] sm:$0xff]
        %v561 = vld [vmem:[%s462 + $0x310] sm:$0xff]
        %v562 = vld [vmem:[%s462 + $0x318] sm:$0xff]
        %v563 = vld [vmem:[%s462 + $0x320] sm:$0xff]
        %v564 = vld [vmem:[%s462 + $0x328] sm:$0xff]
        %v565 = vld [vmem:[%s462 + $0x330] sm:$0xff]
        %v566 = vld [vmem:[%s462 + $0x338] sm:$0xff]
        %v567 = vld [vmem:[%s462 + $0x340] sm:$0xff]
        %v568 = vld [vmem:[%s462 + $0x348] sm:$0xff]
        %v569 = vld [vmem:[%s462 + $0x350] sm:$0xff]
        %v570 = vld [vmem:[%s462 + $0x358] sm:$0xff]
        %v571 = vld [vmem:[%s462 + $0x360] sm:$0xff]
        %v572 = vld [vmem:[%s462 + $0x368] sm:$0xff]
        %v573 = vld [vmem:[%s462 + $0x370] sm:$0xff]
        %v574 = vld [vmem:[%s462 + $0x378] sm:$0xff]
        %v575 = vld [vmem:[%s462 + $0x380] sm:$0xff]
        %v576 = vld [vmem:[%s462 + $0x388] sm:$0xff]
        %v577 = vld [vmem:[%s462 + $0x390] sm:$0xff]
        %v578 = vld [vmem:[%s462 + $0x398] sm:$0xff]
        %v579 = vld [vmem:[%s462 + $0x3a0] sm:$0xff]
        %v580 = vld [vmem:[%s462 + $0x3a8] sm:$0xff]
        %v581 = vld [vmem:[%s462 + $0x3b0] sm:$0xff]
        %v582 = vld [vmem:[%s462 + $0x3b8] sm:$0xff]
        %v583 = vld [vmem:[%s462 + $0x3c0] sm:$0xff]
        %v584 = vld [vmem:[%s462 + $0x3c8] sm:$0xff]
        %v585 = vld [vmem:[%s462 + $0x3d0] sm:$0xff]
        %v586 = vld [vmem:[%s462 + $0x3d8] sm:$0xff]
        %v587 = vld [vmem:[%s462 + $0x3e0] sm:$0xff]
        %v588 = vld [vmem:[%s462 + $0x3e8] sm:$0xff]
        %v589 = vld [vmem:[%s462 + $0x3f0] sm:$0xff]
        %v590 = vld [vmem:[%s462 + $0x3f8] sm:$0xff]
        %v591 = vld [vmem:[%s462 + $0x400] sm:$0xff]
        %v592 = vld [vmem:[%s462 + $0x408] sm:$0xff]
        %v593 = vld [vmem:[%s462 + $0x410] sm:$0xff]
        %v594 = vld [vmem:[%s462 + $0x418] sm:$0xff]
        %v595 = vld [vmem:[%s462 + $0x420] sm:$0xff]
        %v596 = vld [vmem:[%s462 + $0x428] sm:$0xff]
        %v597 = vld [vmem:[%s462 + $0x430] sm:$0xff]
        %v598 = vld [vmem:[%s462 + $0x438] sm:$0xff]
        %v599 = vld [vmem:[%s462 + $0x440] sm:$0xff]
        %v600 = vld [vmem:[%s462 + $0x448] sm:$0xff]
        %v601 = vld [vmem:[%s462 + $0x450] sm:$0xff]
        %v602 = vld [vmem:[%s462 + $0x458] sm:$0xff]
        %v603 = vld [vmem:[%s462 + $0x460] sm:$0xff]
        %v604 = vld [vmem:[%s462 + $0x468] sm:$0xff]
        %v605 = vld [vmem:[%s462 + $0x470] sm:$0xff]
        %v606 = vld [vmem:[%s462 + $0x478] sm:$0xff]
        %v607 = vld [vmem:[%s462 + $0x480] sm:$0xff]
        %v608 = vld [vmem:[%s462 + $0x488] sm:$0xff]
        %v609 = vld [vmem:[%s462 + $0x490] sm:$0xff]
        %v610 = vld [vmem:[%s462 + $0x498] sm:$0xff]
        %v611 = vld [vmem:[%s462 + $0x4a0] sm:$0xff]
        %v612 = vld [vmem:[%s462 + $0x4a8] sm:$0xff]
        %v613 = vld [vmem:[%s462 + $0x4b0] sm:$0xff]
        %v614 = vld [vmem:[%s462 + $0x4b8] sm:$0xff]
        %v615 = vld [vmem:[%s462 + $0x4c0] sm:$0xff]
        %v616 = vld [vmem:[%s462 + $0x4c8] sm:$0xff]
        %v617 = vld [vmem:[%s462 + $0x4d0] sm:$0xff]
        %v618 = vld [vmem:[%s462 + $0x4d8] sm:$0xff]
        %v619 = vld [vmem:[%s462 + $0x4e0] sm:$0xff]
        %v620 = vld [vmem:[%s462 + $0x4e8] sm:$0xff]
        %v621 = vld [vmem:[%s462 + $0x4f0] sm:$0xff]
        %v622 = vld [vmem:[%s462 + $0x4f8] sm:$0xff]
        %v623 = vld [vmem:[%s462 + $0x500] sm:$0xff]
        %v624 = vld [vmem:[%s462 + $0x508] sm:$0xff]
        %v625 = vld [vmem:[%s462 + $0x510] sm:$0xff]
        %v626 = vld [vmem:[%s462 + $0x518] sm:$0xff]
        %v627 = vld [vmem:[%s462 + $0x520] sm:$0xff]
        %v628 = vld [vmem:[%s462 + $0x528] sm:$0xff]
        %v629 = vld [vmem:[%s462 + $0x530] sm:$0xff]
        %v630 = vld [vmem:[%s462 + $0x538] sm:$0xff]
        %v631 = vld [vmem:[%s462 + $0x540] sm:$0xff]
        %v632 = vld [vmem:[%s462 + $0x548] sm:$0xff]
        %v633 = vld [vmem:[%s462 + $0x550] sm:$0xff]
        %v634 = vld [vmem:[%s462 + $0x558] sm:$0xff]
        %v635 = vld [vmem:[%s462 + $0x560] sm:$0xff]
        %v636 = vld [vmem:[%s462 + $0x568] sm:$0xff]
        %v637 = vld [vmem:[%s462 + $0x570] sm:$0xff]
        %v638 = vld [vmem:[%s462 + $0x578] sm:$0xff]
        %v639 = vld [vmem:[%s462 + $0x580] sm:$0xff]
        %v640 = vld [vmem:[%s462 + $0x588] sm:$0xff]
        %v641 = vld [vmem:[%s462 + $0x590] sm:$0xff]
        %v642 = vld [vmem:[%s462 + $0x598] sm:$0xff]
        %v643 = vld [vmem:[%s462 + $0x5a0] sm:$0xff]
        %v644 = vld [vmem:[%s462 + $0x5a8] sm:$0xff]
        %v645 = vld [vmem:[%s462 + $0x5b0] sm:$0xff]
        %v646 = vld [vmem:[%s462 + $0x5b8] sm:$0xff]
        %v647 = vld [vmem:[%s462 + $0x5c0] sm:$0xff]
        %v648 = vld [vmem:[%s462 + $0x5c8] sm:$0xff]
        %v649 = vld [vmem:[%s462 + $0x5d0] sm:$0xff]
        %v650 = vld [vmem:[%s462 + $0x5d8] sm:$0xff]
        %v651 = vld [vmem:[%s462 + $0x5e0] sm:$0xff]
        %v652 = vld [vmem:[%s462 + $0x5e8] sm:$0xff]
        %v653 = vld [vmem:[%s462 + $0x5f0] sm:$0xff]
        %v654 = vld [vmem:[%s462 + $0x5f8] sm:$0xff]
        %v655 = vld [vmem:[%s462 + $0x600] sm:$0xff]
        %v656 = vld [vmem:[%s462 + $0x608] sm:$0xff]
        %v657 = vld [vmem:[%s462 + $0x610] sm:$0xff]
        %v658 = vld [vmem:[%s462 + $0x618] sm:$0xff]
        %v659 = vld [vmem:[%s462 + $0x620] sm:$0xff]
        %v660 = vld [vmem:[%s462 + $0x628] sm:$0xff]
        %v661 = vld [vmem:[%s462 + $0x630] sm:$0xff]
        %v662 = vld [vmem:[%s462 + $0x638] sm:$0xff]
        %v663 = vld [vmem:[%s462 + $0x640] sm:$0xff]
        %v664 = vld [vmem:[%s462 + $0x648] sm:$0xff]
        %v665 = vld [vmem:[%s462 + $0x650] sm:$0xff]
        %v666 = vld [vmem:[%s462 + $0x658] sm:$0xff]
        %v667 = vld [vmem:[%s462 + $0x660] sm:$0xff]
        %v668 = vld [vmem:[%s462 + $0x668] sm:$0xff]
        %v669 = vld [vmem:[%s462 + $0x670] sm:$0xff]
        %v670 = vld [vmem:[%s462 + $0x678] sm:$0xff]
        %v671 = vld [vmem:[%s462 + $0x680] sm:$0xff]
        %v672 = vld [vmem:[%s462 + $0x688] sm:$0xff]
        %v673 = vld [vmem:[%s462 + $0x690] sm:$0xff]
        %v674 = vld [vmem:[%s462 + $0x698] sm:$0xff]
        %v675 = vld [vmem:[%s462 + $0x6a0] sm:$0xff]
        %v676 = vld [vmem:[%s462 + $0x6a8] sm:$0xff]
        %v677 = vld [vmem:[%s462 + $0x6b0] sm:$0xff]
        %v678 = vld [vmem:[%s462 + $0x6b8] sm:$0xff]
        %v679 = vld [vmem:[%s462 + $0x6c0] sm:$0xff]
        %v680 = vld [vmem:[%s462 + $0x6c8] sm:$0xff]
        %v681 = vld [vmem:[%s462 + $0x6d0] sm:$0xff]
        %v682 = vld [vmem:[%s462 + $0x6d8] sm:$0xff]
        %v683 = vld [vmem:[%s462 + $0x6e0] sm:$0xff]
        %v684 = vld [vmem:[%s462 + $0x6e8] sm:$0xff]
        %v685 = vld [vmem:[%s462 + $0x6f0] sm:$0xff]
        %v686 = vld [vmem:[%s462 + $0x6f8] sm:$0xff]
        %v687 = vld [vmem:[%s462 + $0x700] sm:$0xff]
        %v688 = vld [vmem:[%s462 + $0x708] sm:$0xff]
        %v689 = vld [vmem:[%s462 + $0x710] sm:$0xff]
        %v690 = vld [vmem:[%s462 + $0x718] sm:$0xff]
        %v691 = vld [vmem:[%s462 + $0x720] sm:$0xff]
        %v692 = vld [vmem:[%s462 + $0x728] sm:$0xff]
        %v693 = vld [vmem:[%s462 + $0x730] sm:$0xff]
        %v694 = vld [vmem:[%s462 + $0x738] sm:$0xff]
        %v695 = vld [vmem:[%s462 + $0x740] sm:$0xff]
        %v696 = vld [vmem:[%s462 + $0x748] sm:$0xff]
        %v697 = vld [vmem:[%s462 + $0x750] sm:$0xff]
        %v698 = vld [vmem:[%s462 + $0x758] sm:$0xff]
        %v699 = vld [vmem:[%s462 + $0x760] sm:$0xff]
        %v700 = vld [vmem:[%s462 + $0x768] sm:$0xff]
        %v701 = vld [vmem:[%s462 + $0x770] sm:$0xff]
        %v702 = vld [vmem:[%s462 + $0x778] sm:$0xff]
        %v703 = vld [vmem:[%s462 + $0x780] sm:$0xff]
        %v704 = vld [vmem:[%s462 + $0x788] sm:$0xff]
        %v705 = vld [vmem:[%s462 + $0x790] sm:$0xff]
        %v706 = vld [vmem:[%s462 + $0x798] sm:$0xff]
        %v707 = vld [vmem:[%s462 + $0x7a0] sm:$0xff]
        %v708 = vld [vmem:[%s462 + $0x7a8] sm:$0xff]
        %v709 = vld [vmem:[%s462 + $0x7b0] sm:$0xff]
        %v710 = vld [vmem:[%s462 + $0x7b8] sm:$0xff]
        %v711 = vld [vmem:[%s462 + $0x7c0] sm:$0xff]
        %v712 = vld [vmem:[%s462 + $0x7c8] sm:$0xff]
        %v713 = vld [vmem:[%s462 + $0x7d0] sm:$0xff]
        %v714 = vld [vmem:[%s462 + $0x7d8] sm:$0xff]
        %v715 = vld [vmem:[%s462 + $0x7e0] sm:$0xff]
        %v716 = vld [vmem:[%s462 + $0x7e8] sm:$0xff]
        %v717 = vld [vmem:[%s462 + $0x7f0] sm:$0xff]
        %v718 = vld [vmem:[%s462 + $0x7f8] sm:$0xff]
        %v719 = vld [vmem:[#allocation2] sm:$0x3]
        %v720 = vpack.c.bf16 %v351, %v351
        %v721 = vpack.c.bf16 %v358, %v358
        %v722 = vpack.c.bf16 %v365, %v365
        %v723 = vpack.c.bf16 %v372, %v372
        %v724 = vpack.c.bf16 %v379, %v379
        %v725 = vpack.c.bf16 %v386, %v386
        %v726 = vpack.c.bf16 %v393, %v393
        %v727 = vpack.c.bf16 %v400, %v400
        %v728 = vpack.c.bf16 %v407, %v407
        %v729 = vpack.c.bf16 %v414, %v414
        %v730 = vpack.c.bf16 %v421, %v421
        %v731 = vpack.c.bf16 %v428, %v428
        %v732 = vpack.c.bf16 %v435, %v435
        %v733 = vpack.c.bf16 %v442, %v442
        %v734 = vpack.c.bf16 %v449, %v449
        %v735 = vpack.c.bf16 %v456, %v456
        %v992 = vunpack.c.l.b16 %v463
        %v993 = vunpack.c.h.b16 %v463
        %v994 = vunpack.c.l.b16 %v464
        %v995 = vunpack.c.h.b16 %v464
        %v996 = vunpack.c.l.b16 %v465
        %v997 = vunpack.c.h.b16 %v465
        %v998 = vunpack.c.l.b16 %v466
        %v999 = vunpack.c.h.b16 %v466
        %v1000 = vunpack.c.l.b16 %v467
        %v1001 = vunpack.c.h.b16 %v467
        %v1002 = vunpack.c.l.b16 %v468
        %v1003 = vunpack.c.h.b16 %v468
        %v1004 = vunpack.c.l.b16 %v469
        %v1005 = vunpack.c.h.b16 %v469
        %v1006 = vunpack.c.l.b16 %v470
        %v1007 = vunpack.c.h.b16 %v470
        %v1008 = vunpack.c.l.b16 %v471
        %v1009 = vunpack.c.h.b16 %v471
        %v1010 = vunpack.c.l.b16 %v472
        %v1011 = vunpack.c.h.b16 %v472
        %v1012 = vunpack.c.l.b16 %v473
        %v1013 = vunpack.c.h.b16 %v473
        %v1014 = vunpack.c.l.b16 %v474
        %v1015 = vunpack.c.h.b16 %v474
        %v1016 = vunpack.c.l.b16 %v475
        %v1017 = vunpack.c.h.b16 %v475
        %v1018 = vunpack.c.l.b16 %v476
        %v1019 = vunpack.c.h.b16 %v476
        %v1020 = vunpack.c.l.b16 %v477
        %v1021 = vunpack.c.h.b16 %v477
        %v1022 = vunpack.c.l.b16 %v478
        %v1023 = vunpack.c.h.b16 %v478
        %v1024 = vunpack.c.l.b16 %v479
        %v1025 = vunpack.c.h.b16 %v479
        %v1026 = vunpack.c.l.b16 %v480
        %v1027 = vunpack.c.h.b16 %v480
        %v1028 = vunpack.c.l.b16 %v481
        %v1029 = vunpack.c.h.b16 %v481
        %v1030 = vunpack.c.l.b16 %v482
        %v1031 = vunpack.c.h.b16 %v482
        %v1032 = vunpack.c.l.b16 %v483
        %v1033 = vunpack.c.h.b16 %v483
        %v1034 = vunpack.c.l.b16 %v484
        %v1035 = vunpack.c.h.b16 %v484
        %v1036 = vunpack.c.l.b16 %v485
        %v1037 = vunpack.c.h.b16 %v485
        %v1038 = vunpack.c.l.b16 %v486
        %v1039 = vunpack.c.h.b16 %v486
        %v1040 = vunpack.c.l.b16 %v487
        %v1041 = vunpack.c.h.b16 %v487
        %v1042 = vunpack.c.l.b16 %v488
        %v1043 = vunpack.c.h.b16 %v488
        %v1044 = vunpack.c.l.b16 %v489
        %v1045 = vunpack.c.h.b16 %v489
        %v1046 = vunpack.c.l.b16 %v490
        %v1047 = vunpack.c.h.b16 %v490
        %v1048 = vunpack.c.l.b16 %v491
        %v1049 = vunpack.c.h.b16 %v491
        %v1050 = vunpack.c.l.b16 %v492
        %v1051 = vunpack.c.h.b16 %v492
        %v1052 = vunpack.c.l.b16 %v493
        %v1053 = vunpack.c.h.b16 %v493
        %v1054 = vunpack.c.l.b16 %v494
        %v1055 = vunpack.c.h.b16 %v494
        %v1056 = vunpack.c.l.b16 %v495
        %v1057 = vunpack.c.h.b16 %v495
        %v1058 = vunpack.c.l.b16 %v496
        %v1059 = vunpack.c.h.b16 %v496
        %v1060 = vunpack.c.l.b16 %v497
        %v1061 = vunpack.c.h.b16 %v497
        %v1062 = vunpack.c.l.b16 %v498
        %v1063 = vunpack.c.h.b16 %v498
        %v1064 = vunpack.c.l.b16 %v499
        %v1065 = vunpack.c.h.b16 %v499
        %v1066 = vunpack.c.l.b16 %v500
        %v1067 = vunpack.c.h.b16 %v500
        %v1068 = vunpack.c.l.b16 %v501
        %v1069 = vunpack.c.h.b16 %v501
        %v1070 = vunpack.c.l.b16 %v502
        %v1071 = vunpack.c.h.b16 %v502
        %v1072 = vunpack.c.l.b16 %v503
        %v1073 = vunpack.c.h.b16 %v503
        %v1074 = vunpack.c.l.b16 %v504
        %v1075 = vunpack.c.h.b16 %v504
        %v1076 = vunpack.c.l.b16 %v505
        %v1077 = vunpack.c.h.b16 %v505
        %v1078 = vunpack.c.l.b16 %v506
        %v1079 = vunpack.c.h.b16 %v506
        %v1080 = vunpack.c.l.b16 %v507
        %v1081 = vunpack.c.h.b16 %v507
        %v1082 = vunpack.c.l.b16 %v508
        %v1083 = vunpack.c.h.b16 %v508
        %v1084 = vunpack.c.l.b16 %v509
        %v1085 = vunpack.c.h.b16 %v509
        %v1086 = vunpack.c.l.b16 %v510
        %v1087 = vunpack.c.h.b16 %v510
        %v1088 = vunpack.c.l.b16 %v511
        %v1089 = vunpack.c.h.b16 %v511
        %v1090 = vunpack.c.l.b16 %v512
        %v1091 = vunpack.c.h.b16 %v512
        %v1092 = vunpack.c.l.b16 %v513
        %v1093 = vunpack.c.h.b16 %v513
        %v1094 = vunpack.c.l.b16 %v514
        %v1095 = vunpack.c.h.b16 %v514
        %v1096 = vunpack.c.l.b16 %v515
        %v1097 = vunpack.c.h.b16 %v515
        %v1098 = vunpack.c.l.b16 %v516
        %v1099 = vunpack.c.h.b16 %v516
        %v1100 = vunpack.c.l.b16 %v517
        %v1101 = vunpack.c.h.b16 %v517
        %v1102 = vunpack.c.l.b16 %v518
        %v1103 = vunpack.c.h.b16 %v518
        %v1104 = vunpack.c.l.b16 %v519
        %v1105 = vunpack.c.h.b16 %v519
        %v1106 = vunpack.c.l.b16 %v520
        %v1107 = vunpack.c.h.b16 %v520
        %v1108 = vunpack.c.l.b16 %v521
        %v1109 = vunpack.c.h.b16 %v521
        %v1110 = vunpack.c.l.b16 %v522
        %v1111 = vunpack.c.h.b16 %v522
        %v1112 = vunpack.c.l.b16 %v523
        %v1113 = vunpack.c.h.b16 %v523
        %v1114 = vunpack.c.l.b16 %v524
        %v1115 = vunpack.c.h.b16 %v524
        %v1116 = vunpack.c.l.b16 %v525
        %v1117 = vunpack.c.h.b16 %v525
        %v1118 = vunpack.c.l.b16 %v526
        %v1119 = vunpack.c.h.b16 %v526
        %v1120 = vunpack.c.l.b16 %v527
        %v1121 = vunpack.c.h.b16 %v527
        %v1122 = vunpack.c.l.b16 %v528
        %v1123 = vunpack.c.h.b16 %v528
        %v1124 = vunpack.c.l.b16 %v529
        %v1125 = vunpack.c.h.b16 %v529
        %v1126 = vunpack.c.l.b16 %v530
        %v1127 = vunpack.c.h.b16 %v530
        %v1128 = vunpack.c.l.b16 %v531
        %v1129 = vunpack.c.h.b16 %v531
        %v1130 = vunpack.c.l.b16 %v532
        %v1131 = vunpack.c.h.b16 %v532
        %v1132 = vunpack.c.l.b16 %v533
        %v1133 = vunpack.c.h.b16 %v533
        %v1134 = vunpack.c.l.b16 %v534
        %v1135 = vunpack.c.h.b16 %v534
        %v1136 = vunpack.c.l.b16 %v535
        %v1137 = vunpack.c.h.b16 %v535
        %v1138 = vunpack.c.l.b16 %v536
        %v1139 = vunpack.c.h.b16 %v536
        %v1140 = vunpack.c.l.b16 %v537
        %v1141 = vunpack.c.h.b16 %v537
        %v1142 = vunpack.c.l.b16 %v538
        %v1143 = vunpack.c.h.b16 %v538
        %v1144 = vunpack.c.l.b16 %v539
        %v1145 = vunpack.c.h.b16 %v539
        %v1146 = vunpack.c.l.b16 %v540
        %v1147 = vunpack.c.h.b16 %v540
        %v1148 = vunpack.c.l.b16 %v541
        %v1149 = vunpack.c.h.b16 %v541
        %v1150 = vunpack.c.l.b16 %v542
        %v1151 = vunpack.c.h.b16 %v542
        %v1152 = vunpack.c.l.b16 %v543
        %v1153 = vunpack.c.h.b16 %v543
        %v1154 = vunpack.c.l.b16 %v544
        %v1155 = vunpack.c.h.b16 %v544
        %v1156 = vunpack.c.l.b16 %v545
        %v1157 = vunpack.c.h.b16 %v545
        %v1158 = vunpack.c.l.b16 %v546
        %v1159 = vunpack.c.h.b16 %v546
        %v1160 = vunpack.c.l.b16 %v547
        %v1161 = vunpack.c.h.b16 %v547
        %v1162 = vunpack.c.l.b16 %v548
        %v1163 = vunpack.c.h.b16 %v548
        %v1164 = vunpack.c.l.b16 %v549
        %v1165 = vunpack.c.h.b16 %v549
        %v1166 = vunpack.c.l.b16 %v550
        %v1167 = vunpack.c.h.b16 %v550
        %v1168 = vunpack.c.l.b16 %v551
        %v1169 = vunpack.c.h.b16 %v551
        %v1170 = vunpack.c.l.b16 %v552
        %v1171 = vunpack.c.h.b16 %v552
        %v1172 = vunpack.c.l.b16 %v553
        %v1173 = vunpack.c.h.b16 %v553
        %v1174 = vunpack.c.l.b16 %v554
        %v1175 = vunpack.c.h.b16 %v554
        %v1176 = vunpack.c.l.b16 %v555
        %v1177 = vunpack.c.h.b16 %v555
        %v1178 = vunpack.c.l.b16 %v556
        %v1179 = vunpack.c.h.b16 %v556
        %v1180 = vunpack.c.l.b16 %v557
        %v1181 = vunpack.c.h.b16 %v557
        %v1182 = vunpack.c.l.b16 %v558
        %v1183 = vunpack.c.h.b16 %v558
        %v1184 = vunpack.c.l.b16 %v559
        %v1185 = vunpack.c.h.b16 %v559
        %v1186 = vunpack.c.l.b16 %v560
        %v1187 = vunpack.c.h.b16 %v560
        %v1188 = vunpack.c.l.b16 %v561
        %v1189 = vunpack.c.h.b16 %v561
        %v1190 = vunpack.c.l.b16 %v562
        %v1191 = vunpack.c.h.b16 %v562
        %v1192 = vunpack.c.l.b16 %v563
        %v1193 = vunpack.c.h.b16 %v563
        %v1194 = vunpack.c.l.b16 %v564
        %v1195 = vunpack.c.h.b16 %v564
        %v1196 = vunpack.c.l.b16 %v565
        %v1197 = vunpack.c.h.b16 %v565
        %v1198 = vunpack.c.l.b16 %v566
        %v1199 = vunpack.c.h.b16 %v566
        %v1200 = vunpack.c.l.b16 %v567
        %v1201 = vunpack.c.h.b16 %v567
        %v1202 = vunpack.c.l.b16 %v568
        %v1203 = vunpack.c.h.b16 %v568
        %v1204 = vunpack.c.l.b16 %v569
        %v1205 = vunpack.c.h.b16 %v569
        %v1206 = vunpack.c.l.b16 %v570
        %v1207 = vunpack.c.h.b16 %v570
        %v1208 = vunpack.c.l.b16 %v571
        %v1209 = vunpack.c.h.b16 %v571
        %v1210 = vunpack.c.l.b16 %v572
        %v1211 = vunpack.c.h.b16 %v572
        %v1212 = vunpack.c.l.b16 %v573
        %v1213 = vunpack.c.h.b16 %v573
        %v1214 = vunpack.c.l.b16 %v574
        %v1215 = vunpack.c.h.b16 %v574
        %v1216 = vunpack.c.l.b16 %v575
        %v1217 = vunpack.c.h.b16 %v575
        %v1218 = vunpack.c.l.b16 %v576
        %v1219 = vunpack.c.h.b16 %v576
        %v1220 = vunpack.c.l.b16 %v577
        %v1221 = vunpack.c.h.b16 %v577
        %v1222 = vunpack.c.l.b16 %v578
        %v1223 = vunpack.c.h.b16 %v578
        %v1224 = vunpack.c.l.b16 %v579
        %v1225 = vunpack.c.h.b16 %v579
        %v1226 = vunpack.c.l.b16 %v580
        %v1227 = vunpack.c.h.b16 %v580
        %v1228 = vunpack.c.l.b16 %v581
        %v1229 = vunpack.c.h.b16 %v581
        %v1230 = vunpack.c.l.b16 %v582
        %v1231 = vunpack.c.h.b16 %v582
        %v1232 = vunpack.c.l.b16 %v583
        %v1233 = vunpack.c.h.b16 %v583
        %v1234 = vunpack.c.l.b16 %v584
        %v1235 = vunpack.c.h.b16 %v584
        %v1236 = vunpack.c.l.b16 %v585
        %v1237 = vunpack.c.h.b16 %v585
        %v1238 = vunpack.c.l.b16 %v586
        %v1239 = vunpack.c.h.b16 %v586
        %v1240 = vunpack.c.l.b16 %v587
        %v1241 = vunpack.c.h.b16 %v587
        %v1242 = vunpack.c.l.b16 %v588
        %v1243 = vunpack.c.h.b16 %v588
        %v1244 = vunpack.c.l.b16 %v589
        %v1245 = vunpack.c.h.b16 %v589
        %v1246 = vunpack.c.l.b16 %v590
        %v1247 = vunpack.c.h.b16 %v590
        %v1248 = vunpack.c.l.b16 %v591
        %v1249 = vunpack.c.h.b16 %v591
        %v1250 = vunpack.c.l.b16 %v592
        %v1251 = vunpack.c.h.b16 %v592
        %v1252 = vunpack.c.l.b16 %v593
        %v1253 = vunpack.c.h.b16 %v593
        %v1254 = vunpack.c.l.b16 %v594
        %v1255 = vunpack.c.h.b16 %v594
        %v1256 = vunpack.c.l.b16 %v595
        %v1257 = vunpack.c.h.b16 %v595
        %v1258 = vunpack.c.l.b16 %v596
        %v1259 = vunpack.c.h.b16 %v596
        %v1260 = vunpack.c.l.b16 %v597
        %v1261 = vunpack.c.h.b16 %v597
        %v1262 = vunpack.c.l.b16 %v598
        %v1263 = vunpack.c.h.b16 %v598
        %v1264 = vunpack.c.l.b16 %v599
        %v1265 = vunpack.c.h.b16 %v599
        %v1266 = vunpack.c.l.b16 %v600
        %v1267 = vunpack.c.h.b16 %v600
        %v1268 = vunpack.c.l.b16 %v601
        %v1269 = vunpack.c.h.b16 %v601
        %v1270 = vunpack.c.l.b16 %v602
        %v1271 = vunpack.c.h.b16 %v602
        %v1272 = vunpack.c.l.b16 %v603
        %v1273 = vunpack.c.h.b16 %v603
        %v1274 = vunpack.c.l.b16 %v604
        %v1275 = vunpack.c.h.b16 %v604
        %v1276 = vunpack.c.l.b16 %v605
        %v1277 = vunpack.c.h.b16 %v605
        %v1278 = vunpack.c.l.b16 %v606
        %v1279 = vunpack.c.h.b16 %v606
        %v1280 = vunpack.c.l.b16 %v607
        %v1281 = vunpack.c.h.b16 %v607
        %v1282 = vunpack.c.l.b16 %v608
        %v1283 = vunpack.c.h.b16 %v608
        %v1284 = vunpack.c.l.b16 %v609
        %v1285 = vunpack.c.h.b16 %v609
        %v1286 = vunpack.c.l.b16 %v610
        %v1287 = vunpack.c.h.b16 %v610
        %v1288 = vunpack.c.l.b16 %v611
        %v1289 = vunpack.c.h.b16 %v611
        %v1290 = vunpack.c.l.b16 %v612
        %v1291 = vunpack.c.h.b16 %v612
        %v1292 = vunpack.c.l.b16 %v613
        %v1293 = vunpack.c.h.b16 %v613
        %v1294 = vunpack.c.l.b16 %v614
        %v1295 = vunpack.c.h.b16 %v614
        %v1296 = vunpack.c.l.b16 %v615
        %v1297 = vunpack.c.h.b16 %v615
        %v1298 = vunpack.c.l.b16 %v616
        %v1299 = vunpack.c.h.b16 %v616
        %v1300 = vunpack.c.l.b16 %v617
        %v1301 = vunpack.c.h.b16 %v617
        %v1302 = vunpack.c.l.b16 %v618
        %v1303 = vunpack.c.h.b16 %v618
        %v1304 = vunpack.c.l.b16 %v619
        %v1305 = vunpack.c.h.b16 %v619
        %v1306 = vunpack.c.l.b16 %v620
        %v1307 = vunpack.c.h.b16 %v620
        %v1308 = vunpack.c.l.b16 %v621
        %v1309 = vunpack.c.h.b16 %v621
        %v1310 = vunpack.c.l.b16 %v622
        %v1311 = vunpack.c.h.b16 %v622
        %v1312 = vunpack.c.l.b16 %v623
        %v1313 = vunpack.c.h.b16 %v623
        %v1314 = vunpack.c.l.b16 %v624
        %v1315 = vunpack.c.h.b16 %v624
        %v1316 = vunpack.c.l.b16 %v625
        %v1317 = vunpack.c.h.b16 %v625
        %v1318 = vunpack.c.l.b16 %v626
        %v1319 = vunpack.c.h.b16 %v626
        %v1320 = vunpack.c.l.b16 %v627
        %v1321 = vunpack.c.h.b16 %v627
        %v1322 = vunpack.c.l.b16 %v628
        %v1323 = vunpack.c.h.b16 %v628
        %v1324 = vunpack.c.l.b16 %v629
        %v1325 = vunpack.c.h.b16 %v629
        %v1326 = vunpack.c.l.b16 %v630
        %v1327 = vunpack.c.h.b16 %v630
        %v1328 = vunpack.c.l.b16 %v631
        %v1329 = vunpack.c.h.b16 %v631
        %v1330 = vunpack.c.l.b16 %v632
        %v1331 = vunpack.c.h.b16 %v632
        %v1332 = vunpack.c.l.b16 %v633
        %v1333 = vunpack.c.h.b16 %v633
        %v1334 = vunpack.c.l.b16 %v634
        %v1335 = vunpack.c.h.b16 %v634
        %v1336 = vunpack.c.l.b16 %v635
        %v1337 = vunpack.c.h.b16 %v635
        %v1338 = vunpack.c.l.b16 %v636
        %v1339 = vunpack.c.h.b16 %v636
        %v1340 = vunpack.c.l.b16 %v637
        %v1341 = vunpack.c.h.b16 %v637
        %v1342 = vunpack.c.l.b16 %v638
        %v1343 = vunpack.c.h.b16 %v638
        %v1344 = vunpack.c.l.b16 %v639
        %v1345 = vunpack.c.h.b16 %v639
        %v1346 = vunpack.c.l.b16 %v640
        %v1347 = vunpack.c.h.b16 %v640
        %v1348 = vunpack.c.l.b16 %v641
        %v1349 = vunpack.c.h.b16 %v641
        %v1350 = vunpack.c.l.b16 %v642
        %v1351 = vunpack.c.h.b16 %v642
        %v1352 = vunpack.c.l.b16 %v643
        %v1353 = vunpack.c.h.b16 %v643
        %v1354 = vunpack.c.l.b16 %v644
        %v1355 = vunpack.c.h.b16 %v644
        %v1356 = vunpack.c.l.b16 %v645
        %v1357 = vunpack.c.h.b16 %v645
        %v1358 = vunpack.c.l.b16 %v646
        %v1359 = vunpack.c.h.b16 %v646
        %v1360 = vunpack.c.l.b16 %v647
        %v1361 = vunpack.c.h.b16 %v647
        %v1362 = vunpack.c.l.b16 %v648
        %v1363 = vunpack.c.h.b16 %v648
        %v1364 = vunpack.c.l.b16 %v649
        %v1365 = vunpack.c.h.b16 %v649
        %v1366 = vunpack.c.l.b16 %v650
        %v1367 = vunpack.c.h.b16 %v650
        %v1368 = vunpack.c.l.b16 %v651
        %v1369 = vunpack.c.h.b16 %v651
        %v1370 = vunpack.c.l.b16 %v652
        %v1371 = vunpack.c.h.b16 %v652
        %v1372 = vunpack.c.l.b16 %v653
        %v1373 = vunpack.c.h.b16 %v653
        %v1374 = vunpack.c.l.b16 %v654
        %v1375 = vunpack.c.h.b16 %v654
        %v1376 = vunpack.c.l.b16 %v655
        %v1377 = vunpack.c.h.b16 %v655
        %v1378 = vunpack.c.l.b16 %v656
        %v1379 = vunpack.c.h.b16 %v656
        %v1380 = vunpack.c.l.b16 %v657
        %v1381 = vunpack.c.h.b16 %v657
        %v1382 = vunpack.c.l.b16 %v658
        %v1383 = vunpack.c.h.b16 %v658
        %v1384 = vunpack.c.l.b16 %v659
        %v1385 = vunpack.c.h.b16 %v659
        %v1386 = vunpack.c.l.b16 %v660
        %v1387 = vunpack.c.h.b16 %v660
        %v1388 = vunpack.c.l.b16 %v661
        %v1389 = vunpack.c.h.b16 %v661
        %v1390 = vunpack.c.l.b16 %v662
        %v1391 = vunpack.c.h.b16 %v662
        %v1392 = vunpack.c.l.b16 %v663
        %v1393 = vunpack.c.h.b16 %v663
        %v1394 = vunpack.c.l.b16 %v664
        %v1395 = vunpack.c.h.b16 %v664
        %v1396 = vunpack.c.l.b16 %v665
        %v1397 = vunpack.c.h.b16 %v665
        %v1398 = vunpack.c.l.b16 %v666
        %v1399 = vunpack.c.h.b16 %v666
        %v1400 = vunpack.c.l.b16 %v667
        %v1401 = vunpack.c.h.b16 %v667
        %v1402 = vunpack.c.l.b16 %v668
        %v1403 = vunpack.c.h.b16 %v668
        %v1404 = vunpack.c.l.b16 %v669
        %v1405 = vunpack.c.h.b16 %v669
        %v1406 = vunpack.c.l.b16 %v670
        %v1407 = vunpack.c.h.b16 %v670
        %v1408 = vunpack.c.l.b16 %v671
        %v1409 = vunpack.c.h.b16 %v671
        %v1410 = vunpack.c.l.b16 %v672
        %v1411 = vunpack.c.h.b16 %v672
        %v1412 = vunpack.c.l.b16 %v673
        %v1413 = vunpack.c.h.b16 %v673
        %v1414 = vunpack.c.l.b16 %v674
        %v1415 = vunpack.c.h.b16 %v674
        %v1416 = vunpack.c.l.b16 %v675
        %v1417 = vunpack.c.h.b16 %v675
        %v1418 = vunpack.c.l.b16 %v676
        %v1419 = vunpack.c.h.b16 %v676
        %v1420 = vunpack.c.l.b16 %v677
        %v1421 = vunpack.c.h.b16 %v677
        %v1422 = vunpack.c.l.b16 %v678
        %v1423 = vunpack.c.h.b16 %v678
        %v1424 = vunpack.c.l.b16 %v679
        %v1425 = vunpack.c.h.b16 %v679
        %v1426 = vunpack.c.l.b16 %v680
        %v1427 = vunpack.c.h.b16 %v680
        %v1428 = vunpack.c.l.b16 %v681
        %v1429 = vunpack.c.h.b16 %v681
        %v1430 = vunpack.c.l.b16 %v682
        %v1431 = vunpack.c.h.b16 %v682
        %v1432 = vunpack.c.l.b16 %v683
        %v1433 = vunpack.c.h.b16 %v683
        %v1434 = vunpack.c.l.b16 %v684
        %v1435 = vunpack.c.h.b16 %v684
        %v1436 = vunpack.c.l.b16 %v685
        %v1437 = vunpack.c.h.b16 %v685
        %v1438 = vunpack.c.l.b16 %v686
        %v1439 = vunpack.c.h.b16 %v686
        %v1440 = vunpack.c.l.b16 %v687
        %v1441 = vunpack.c.h.b16 %v687
        %v1442 = vunpack.c.l.b16 %v688
        %v1443 = vunpack.c.h.b16 %v688
        %v1444 = vunpack.c.l.b16 %v689
        %v1445 = vunpack.c.h.b16 %v689
        %v1446 = vunpack.c.l.b16 %v690
        %v1447 = vunpack.c.h.b16 %v690
        %v1448 = vunpack.c.l.b16 %v691
        %v1449 = vunpack.c.h.b16 %v691
        %v1450 = vunpack.c.l.b16 %v692
        %v1451 = vunpack.c.h.b16 %v692
        %v1452 = vunpack.c.l.b16 %v693
        %v1453 = vunpack.c.h.b16 %v693
        %v1454 = vunpack.c.l.b16 %v694
        %v1455 = vunpack.c.h.b16 %v694
        %v1456 = vunpack.c.l.b16 %v695
        %v1457 = vunpack.c.h.b16 %v695
        %v1458 = vunpack.c.l.b16 %v696
        %v1459 = vunpack.c.h.b16 %v696
        %v1460 = vunpack.c.l.b16 %v697
        %v1461 = vunpack.c.h.b16 %v697
        %v1462 = vunpack.c.l.b16 %v698
        %v1463 = vunpack.c.h.b16 %v698
        %v1464 = vunpack.c.l.b16 %v699
        %v1465 = vunpack.c.h.b16 %v699
        %v1466 = vunpack.c.l.b16 %v700
        %v1467 = vunpack.c.h.b16 %v700
        %v1468 = vunpack.c.l.b16 %v701
        %v1469 = vunpack.c.h.b16 %v701
        %v1470 = vunpack.c.l.b16 %v702
        %v1471 = vunpack.c.h.b16 %v702
        %v1472 = vunpack.c.l.b16 %v703
        %v1473 = vunpack.c.h.b16 %v703
        %v1474 = vunpack.c.l.b16 %v704
        %v1475 = vunpack.c.h.b16 %v704
        %v1476 = vunpack.c.l.b16 %v705
        %v1477 = vunpack.c.h.b16 %v705
        %v1478 = vunpack.c.l.b16 %v706
        %v1479 = vunpack.c.h.b16 %v706
        %v1480 = vunpack.c.l.b16 %v707
        %v1481 = vunpack.c.h.b16 %v707
        %v1482 = vunpack.c.l.b16 %v708
        %v1483 = vunpack.c.h.b16 %v708
        %v1484 = vunpack.c.l.b16 %v709
        %v1485 = vunpack.c.h.b16 %v709
        %v1486 = vunpack.c.l.b16 %v710
        %v1487 = vunpack.c.h.b16 %v710
        %v1488 = vunpack.c.l.b16 %v711
        %v1489 = vunpack.c.h.b16 %v711
        %v1490 = vunpack.c.l.b16 %v712
        %v1491 = vunpack.c.h.b16 %v712
        %v1492 = vunpack.c.l.b16 %v713
        %v1493 = vunpack.c.h.b16 %v713
        %v1494 = vunpack.c.l.b16 %v714
        %v1495 = vunpack.c.h.b16 %v714
        %v1496 = vunpack.c.l.b16 %v715
        %v1497 = vunpack.c.h.b16 %v715
        %v1498 = vunpack.c.l.b16 %v716
        %v1499 = vunpack.c.h.b16 %v716
        %v1500 = vunpack.c.l.b16 %v717
        %v1501 = vunpack.c.h.b16 %v717
        %v1502 = vunpack.c.l.b16 %v718
        %v1503 = vunpack.c.h.b16 %v718
        %v1504 = vpack.c.b16 %v994, %v992
        %v1505 = vpack.c.b16 %v995, %v993
        %v1506 = vpack.c.b16 %v998, %v996
        %v1507 = vpack.c.b16 %v999, %v997
        %v1508 = vpack.c.b16 %v1002, %v1000
        %v1509 = vpack.c.b16 %v1003, %v1001
        %v1510 = vpack.c.b16 %v1006, %v1004
        %v1511 = vpack.c.b16 %v1007, %v1005
        %v1512 = vpack.c.b16 %v1010, %v1008
        %v1513 = vpack.c.b16 %v1011, %v1009
        %v1514 = vpack.c.b16 %v1014, %v1012
        %v1515 = vpack.c.b16 %v1015, %v1013
        %v1516 = vpack.c.b16 %v1018, %v1016
        %v1517 = vpack.c.b16 %v1019, %v1017
        %v1518 = vpack.c.b16 %v1022, %v1020
        %v1519 = vpack.c.b16 %v1023, %v1021
        %v1520 = vpack.c.b16 %v1026, %v1024
        %v1521 = vpack.c.b16 %v1027, %v1025
        %v1522 = vpack.c.b16 %v1030, %v1028
        %v1523 = vpack.c.b16 %v1031, %v1029
        %v1524 = vpack.c.b16 %v1034, %v1032
        %v1525 = vpack.c.b16 %v1035, %v1033
        %v1526 = vpack.c.b16 %v1038, %v1036
        %v1527 = vpack.c.b16 %v1039, %v1037
        %v1528 = vpack.c.b16 %v1042, %v1040
        %v1529 = vpack.c.b16 %v1043, %v1041
        %v1530 = vpack.c.b16 %v1046, %v1044
        %v1531 = vpack.c.b16 %v1047, %v1045
        %v1532 = vpack.c.b16 %v1050, %v1048
        %v1533 = vpack.c.b16 %v1051, %v1049
        %v1534 = vpack.c.b16 %v1054, %v1052
        %v1535 = vpack.c.b16 %v1055, %v1053
        %v1536 = vpack.c.b16 %v1058, %v1056
        %v1537 = vpack.c.b16 %v1059, %v1057
        %v1538 = vpack.c.b16 %v1062, %v1060
        %v1539 = vpack.c.b16 %v1063, %v1061
        %v1540 = vpack.c.b16 %v1066, %v1064
        %v1541 = vpack.c.b16 %v1067, %v1065
        %v1542 = vpack.c.b16 %v1070, %v1068
        %v1543 = vpack.c.b16 %v1071, %v1069
        %v1544 = vpack.c.b16 %v1074, %v1072
        %v1545 = vpack.c.b16 %v1075, %v1073
        %v1546 = vpack.c.b16 %v1078, %v1076
        %v1547 = vpack.c.b16 %v1079, %v1077
        %v1548 = vpack.c.b16 %v1082, %v1080
        %v1549 = vpack.c.b16 %v1083, %v1081
        %v1550 = vpack.c.b16 %v1086, %v1084
        %v1551 = vpack.c.b16 %v1087, %v1085
        %v1552 = vpack.c.b16 %v1090, %v1088
        %v1553 = vpack.c.b16 %v1091, %v1089
        %v1554 = vpack.c.b16 %v1094, %v1092
        %v1555 = vpack.c.b16 %v1095, %v1093
        %v1556 = vpack.c.b16 %v1098, %v1096
        %v1557 = vpack.c.b16 %v1099, %v1097
        %v1558 = vpack.c.b16 %v1102, %v1100
        %v1559 = vpack.c.b16 %v1103, %v1101
        %v1560 = vpack.c.b16 %v1106, %v1104
        %v1561 = vpack.c.b16 %v1107, %v1105
        %v1562 = vpack.c.b16 %v1110, %v1108
        %v1563 = vpack.c.b16 %v1111, %v1109
        %v1564 = vpack.c.b16 %v1114, %v1112
        %v1565 = vpack.c.b16 %v1115, %v1113
        %v1566 = vpack.c.b16 %v1118, %v1116
        %v1567 = vpack.c.b16 %v1119, %v1117
        %v1568 = vpack.c.b16 %v1122, %v1120
        %v1569 = vpack.c.b16 %v1123, %v1121
        %v1570 = vpack.c.b16 %v1126, %v1124
        %v1571 = vpack.c.b16 %v1127, %v1125
        %v1572 = vpack.c.b16 %v1130, %v1128
        %v1573 = vpack.c.b16 %v1131, %v1129
        %v1574 = vpack.c.b16 %v1134, %v1132
        %v1575 = vpack.c.b16 %v1135, %v1133
        %v1576 = vpack.c.b16 %v1138, %v1136
        %v1577 = vpack.c.b16 %v1139, %v1137
        %v1578 = vpack.c.b16 %v1142, %v1140
        %v1579 = vpack.c.b16 %v1143, %v1141
        %v1580 = vpack.c.b16 %v1146, %v1144
        %v1581 = vpack.c.b16 %v1147, %v1145
        %v1582 = vpack.c.b16 %v1150, %v1148
        %v1583 = vpack.c.b16 %v1151, %v1149
        %v1584 = vpack.c.b16 %v1154, %v1152
        %v1585 = vpack.c.b16 %v1155, %v1153
        %v1586 = vpack.c.b16 %v1158, %v1156
        %v1587 = vpack.c.b16 %v1159, %v1157
        %v1588 = vpack.c.b16 %v1162, %v1160
        %v1589 = vpack.c.b16 %v1163, %v1161
        %v1590 = vpack.c.b16 %v1166, %v1164
        %v1591 = vpack.c.b16 %v1167, %v1165
        %v1592 = vpack.c.b16 %v1170, %v1168
        %v1593 = vpack.c.b16 %v1171, %v1169
        %v1594 = vpack.c.b16 %v1174, %v1172
        %v1595 = vpack.c.b16 %v1175, %v1173
        %v1596 = vpack.c.b16 %v1178, %v1176
        %v1597 = vpack.c.b16 %v1179, %v1177
        %v1598 = vpack.c.b16 %v1182, %v1180
        %v1599 = vpack.c.b16 %v1183, %v1181
        %v1600 = vpack.c.b16 %v1186, %v1184
        %v1601 = vpack.c.b16 %v1187, %v1185
        %v1602 = vpack.c.b16 %v1190, %v1188
        %v1603 = vpack.c.b16 %v1191, %v1189
        %v1604 = vpack.c.b16 %v1194, %v1192
        %v1605 = vpack.c.b16 %v1195, %v1193
        %v1606 = vpack.c.b16 %v1198, %v1196
        %v1607 = vpack.c.b16 %v1199, %v1197
        %v1608 = vpack.c.b16 %v1202, %v1200
        %v1609 = vpack.c.b16 %v1203, %v1201
        %v1610 = vpack.c.b16 %v1206, %v1204
        %v1611 = vpack.c.b16 %v1207, %v1205
        %v1612 = vpack.c.b16 %v1210, %v1208
        %v1613 = vpack.c.b16 %v1211, %v1209
        %v1614 = vpack.c.b16 %v1214, %v1212
        %v1615 = vpack.c.b16 %v1215, %v1213
        %v1616 = vpack.c.b16 %v1218, %v1216
        %v1617 = vpack.c.b16 %v1219, %v1217
        %v1618 = vpack.c.b16 %v1222, %v1220
        %v1619 = vpack.c.b16 %v1223, %v1221
        %v1620 = vpack.c.b16 %v1226, %v1224
        %v1621 = vpack.c.b16 %v1227, %v1225
        %v1622 = vpack.c.b16 %v1230, %v1228
        %v1623 = vpack.c.b16 %v1231, %v1229
        %v1624 = vpack.c.b16 %v1234, %v1232
        %v1625 = vpack.c.b16 %v1235, %v1233
        %v1626 = vpack.c.b16 %v1238, %v1236
        %v1627 = vpack.c.b16 %v1239, %v1237
        %v1628 = vpack.c.b16 %v1242, %v1240
        %v1629 = vpack.c.b16 %v1243, %v1241
        %v1630 = vpack.c.b16 %v1246, %v1244
        %v1631 = vpack.c.b16 %v1247, %v1245
        %v1632 = vpack.c.b16 %v1250, %v1248
        %v1633 = vpack.c.b16 %v1251, %v1249
        %v1634 = vpack.c.b16 %v1254, %v1252
        %v1635 = vpack.c.b16 %v1255, %v1253
        %v1636 = vpack.c.b16 %v1258, %v1256
        %v1637 = vpack.c.b16 %v1259, %v1257
        %v1638 = vpack.c.b16 %v1262, %v1260
        %v1639 = vpack.c.b16 %v1263, %v1261
        %v1640 = vpack.c.b16 %v1266, %v1264
        %v1641 = vpack.c.b16 %v1267, %v1265
        %v1642 = vpack.c.b16 %v1270, %v1268
        %v1643 = vpack.c.b16 %v1271, %v1269
        %v1644 = vpack.c.b16 %v1274, %v1272
        %v1645 = vpack.c.b16 %v1275, %v1273
        %v1646 = vpack.c.b16 %v1278, %v1276
        %v1647 = vpack.c.b16 %v1279, %v1277
        %v1648 = vpack.c.b16 %v1282, %v1280
        %v1649 = vpack.c.b16 %v1283, %v1281
        %v1650 = vpack.c.b16 %v1286, %v1284
        %v1651 = vpack.c.b16 %v1287, %v1285
        %v1652 = vpack.c.b16 %v1290, %v1288
        %v1653 = vpack.c.b16 %v1291, %v1289
        %v1654 = vpack.c.b16 %v1294, %v1292
        %v1655 = vpack.c.b16 %v1295, %v1293
        %v1656 = vpack.c.b16 %v1298, %v1296
        %v1657 = vpack.c.b16 %v1299, %v1297
        %v1658 = vpack.c.b16 %v1302, %v1300
        %v1659 = vpack.c.b16 %v1303, %v1301
        %v1660 = vpack.c.b16 %v1306, %v1304
        %v1661 = vpack.c.b16 %v1307, %v1305
        %v1662 = vpack.c.b16 %v1310, %v1308
        %v1663 = vpack.c.b16 %v1311, %v1309
        %v1664 = vpack.c.b16 %v1314, %v1312
        %v1665 = vpack.c.b16 %v1315, %v1313
        %v1666 = vpack.c.b16 %v1318, %v1316
        %v1667 = vpack.c.b16 %v1319, %v1317
        %v1668 = vpack.c.b16 %v1322, %v1320
        %v1669 = vpack.c.b16 %v1323, %v1321
        %v1670 = vpack.c.b16 %v1326, %v1324
        %v1671 = vpack.c.b16 %v1327, %v1325
        %v1672 = vpack.c.b16 %v1330, %v1328
        %v1673 = vpack.c.b16 %v1331, %v1329
        %v1674 = vpack.c.b16 %v1334, %v1332
        %v1675 = vpack.c.b16 %v1335, %v1333
        %v1676 = vpack.c.b16 %v1338, %v1336
        %v1677 = vpack.c.b16 %v1339, %v1337
        %v1678 = vpack.c.b16 %v1342, %v1340
        %v1679 = vpack.c.b16 %v1343, %v1341
        %v1680 = vpack.c.b16 %v1346, %v1344
        %v1681 = vpack.c.b16 %v1347, %v1345
        %v1682 = vpack.c.b16 %v1350, %v1348
        %v1683 = vpack.c.b16 %v1351, %v1349
        %v1684 = vpack.c.b16 %v1354, %v1352
        %v1685 = vpack.c.b16 %v1355, %v1353
        %v1686 = vpack.c.b16 %v1358, %v1356
        %v1687 = vpack.c.b16 %v1359, %v1357
        %v1688 = vpack.c.b16 %v1362, %v1360
        %v1689 = vpack.c.b16 %v1363, %v1361
        %v1690 = vpack.c.b16 %v1366, %v1364
        %v1691 = vpack.c.b16 %v1367, %v1365
        %v1692 = vpack.c.b16 %v1370, %v1368
        %v1693 = vpack.c.b16 %v1371, %v1369
        %v1694 = vpack.c.b16 %v1374, %v1372
        %v1695 = vpack.c.b16 %v1375, %v1373
        %v1696 = vpack.c.b16 %v1378, %v1376
        %v1697 = vpack.c.b16 %v1379, %v1377
        %v1698 = vpack.c.b16 %v1382, %v1380
        %v1699 = vpack.c.b16 %v1383, %v1381
        %v1700 = vpack.c.b16 %v1386, %v1384
        %v1701 = vpack.c.b16 %v1387, %v1385
        %v1702 = vpack.c.b16 %v1390, %v1388
        %v1703 = vpack.c.b16 %v1391, %v1389
        %v1704 = vpack.c.b16 %v1394, %v1392
        %v1705 = vpack.c.b16 %v1395, %v1393
        %v1706 = vpack.c.b16 %v1398, %v1396
        %v1707 = vpack.c.b16 %v1399, %v1397
        %v1708 = vpack.c.b16 %v1402, %v1400
        %v1709 = vpack.c.b16 %v1403, %v1401
        %v1710 = vpack.c.b16 %v1406, %v1404
        %v1711 = vpack.c.b16 %v1407, %v1405
        %v1712 = vpack.c.b16 %v1410, %v1408
        %v1713 = vpack.c.b16 %v1411, %v1409
        %v1714 = vpack.c.b16 %v1414, %v1412
        %v1715 = vpack.c.b16 %v1415, %v1413
        %v1716 = vpack.c.b16 %v1418, %v1416
        %v1717 = vpack.c.b16 %v1419, %v1417
        %v1718 = vpack.c.b16 %v1422, %v1420
        %v1719 = vpack.c.b16 %v1423, %v1421
        %v1720 = vpack.c.b16 %v1426, %v1424
        %v1721 = vpack.c.b16 %v1427, %v1425
        %v1722 = vpack.c.b16 %v1430, %v1428
        %v1723 = vpack.c.b16 %v1431, %v1429
        %v1724 = vpack.c.b16 %v1434, %v1432
        %v1725 = vpack.c.b16 %v1435, %v1433
        %v1726 = vpack.c.b16 %v1438, %v1436
        %v1727 = vpack.c.b16 %v1439, %v1437
        %v1728 = vpack.c.b16 %v1442, %v1440
        %v1729 = vpack.c.b16 %v1443, %v1441
        %v1730 = vpack.c.b16 %v1446, %v1444
        %v1731 = vpack.c.b16 %v1447, %v1445
        %v1732 = vpack.c.b16 %v1450, %v1448
        %v1733 = vpack.c.b16 %v1451, %v1449
        %v1734 = vpack.c.b16 %v1454, %v1452
        %v1735 = vpack.c.b16 %v1455, %v1453
        %v1736 = vpack.c.b16 %v1458, %v1456
        %v1737 = vpack.c.b16 %v1459, %v1457
        %v1738 = vpack.c.b16 %v1462, %v1460
        %v1739 = vpack.c.b16 %v1463, %v1461
        %v1740 = vpack.c.b16 %v1466, %v1464
        %v1741 = vpack.c.b16 %v1467, %v1465
        %v1742 = vpack.c.b16 %v1470, %v1468
        %v1743 = vpack.c.b16 %v1471, %v1469
        %v1744 = vpack.c.b16 %v1474, %v1472
        %v1745 = vpack.c.b16 %v1475, %v1473
        %v1746 = vpack.c.b16 %v1478, %v1476
        %v1747 = vpack.c.b16 %v1479, %v1477
        %v1748 = vpack.c.b16 %v1482, %v1480
        %v1749 = vpack.c.b16 %v1483, %v1481
        %v1750 = vpack.c.b16 %v1486, %v1484
        %v1751 = vpack.c.b16 %v1487, %v1485
        %v1752 = vpack.c.b16 %v1490, %v1488
        %v1753 = vpack.c.b16 %v1491, %v1489
        %v1754 = vpack.c.b16 %v1494, %v1492
        %v1755 = vpack.c.b16 %v1495, %v1493
        %v1756 = vpack.c.b16 %v1498, %v1496
        %v1757 = vpack.c.b16 %v1499, %v1497
        %v1758 = vpack.c.b16 %v1502, %v1500
        %v1759 = vpack.c.b16 %v1503, %v1501
        %2016 = vmatprep.subr.bf16.mxu0 %v1505
        %2017 = vmatpush1.bf16.msra.mxu0 %v1504
        %2018 = vmatprep.subr.bf16.mxu0 %v1507
        %2019 = vmatpush1.bf16.msra.mxu0 %v1506
        %2020 = vmatprep.subr.bf16.mxu0 %v1509
        %2021 = vmatpush1.bf16.msra.mxu0 %v1508
        %2022 = vmatprep.subr.bf16.mxu0 %v1511
        %2023 = vmatpush1.bf16.msra.mxu0 %v1510
        %2024 = vmatprep.subr.bf16.mxu0 %v1513
        %2025 = vmatpush1.bf16.msra.mxu0 %v1512
        %2026 = vmatprep.subr.bf16.mxu0 %v1515
        %2027 = vmatpush1.bf16.msra.mxu0 %v1514
        %2028 = vmatprep.subr.bf16.mxu0 %v1517
        %2029 = vmatpush1.bf16.msra.mxu0 %v1516
        %2030 = vmatprep.subr.bf16.mxu0 %v1519
        %2031 = vmatpush1.bf16.msra.mxu0 %v1518
        %2032 = vmatprep.subr.bf16.mxu0 %v1521
        %2033 = vmatpush1.bf16.msra.mxu0 %v1520
        %2034 = vmatprep.subr.bf16.mxu0 %v1523
        %2035 = vmatpush1.bf16.msra.mxu0 %v1522
        %2036 = vmatprep.subr.bf16.mxu0 %v1525
        %2037 = vmatpush1.bf16.msra.mxu0 %v1524
        %2038 = vmatprep.subr.bf16.mxu0 %v1527
        %2039 = vmatpush1.bf16.msra.mxu0 %v1526
        %2040 = vmatprep.subr.bf16.mxu0 %v1529
        %2041 = vmatpush1.bf16.msra.mxu0 %v1528
        %2042 = vmatprep.subr.bf16.mxu0 %v1531
        %2043 = vmatpush1.bf16.msra.mxu0 %v1530
        %2044 = vmatprep.subr.bf16.mxu0 %v1533
        %2045 = vmatpush1.bf16.msra.mxu0 %v1532
        %2046 = vmatprep.subr.bf16.mxu0 %v1535
        %2047 = vmatpush1.bf16.msra.mxu0 %v1534
        %2048 = vmatprep.mubr.bf16.mxu0 %v721
        %2049 = vmatmul.mubr.bf16.gmra.mrb[0].mxu0 %v720
        %v2050 = vpop.f32.mrb[0].mxu0
        %v2051 = vadd.f32 0.0, %v2050
        %v2052 = vpop.f32.mrb[0].mxu0
        %v2053 = vadd.f32 0.0, %v2052
        %v2054 = vpop.f32.mrb[0].mxu0
        %v2055 = vpop.f32.mrb[0].mxu0
        %2056 = vdwg.mxu0
        %2057 = vmatprep.subr.bf16.mxu0 %v1537
        %2058 = vmatpush1.bf16.msra.mxu0 %v1536
        %2059 = vmatprep.subr.bf16.mxu0 %v1539
        %2060 = vmatpush1.bf16.msra.mxu0 %v1538
        %2061 = vmatprep.subr.bf16.mxu0 %v1541
        %2062 = vmatpush1.bf16.msra.mxu0 %v1540
        %2063 = vmatprep.subr.bf16.mxu0 %v1543
        %2064 = vmatpush1.bf16.msra.mxu0 %v1542
        %2065 = vmatprep.subr.bf16.mxu0 %v1545
        %2066 = vmatpush1.bf16.msra.mxu0 %v1544
        %2067 = vmatprep.subr.bf16.mxu0 %v1547
        %2068 = vmatpush1.bf16.msra.mxu0 %v1546
        %2069 = vmatprep.subr.bf16.mxu0 %v1549
        %2070 = vmatpush1.bf16.msra.mxu0 %v1548
        %2071 = vmatprep.subr.bf16.mxu0 %v1551
        %2072 = vmatpush1.bf16.msra.mxu0 %v1550
        %2073 = vmatprep.subr.bf16.mxu0 %v1553
        %2074 = vmatpush1.bf16.msra.mxu0 %v1552
        %2075 = vmatprep.subr.bf16.mxu0 %v1555
        %2076 = vmatpush1.bf16.msra.mxu0 %v1554
        %2077 = vmatprep.subr.bf16.mxu0 %v1557
        %2078 = vmatpush1.bf16.msra.mxu0 %v1556
        %2079 = vmatprep.subr.bf16.mxu0 %v1559
        %2080 = vmatpush1.bf16.msra.mxu0 %v1558
        %2081 = vmatprep.subr.bf16.mxu0 %v1561
        %2082 = vmatpush1.bf16.msra.mxu0 %v1560
        %2083 = vmatprep.subr.bf16.mxu0 %v1563
        %2084 = vmatpush1.bf16.msra.mxu0 %v1562
        %2085 = vmatprep.subr.bf16.mxu0 %v1565
        %2086 = vmatpush1.bf16.msra.mxu0 %v1564
        %2087 = vmatprep.subr.bf16.mxu0 %v1567
        %2088 = vmatpush1.bf16.msra.mxu0 %v1566
        %2089 = vmatprep.mubr.bf16.mxu0 %v723
        %2090 = vmatmul.mubr.bf16.gmra.mrb[0].mxu0 %v722
        %v2091 = vpop.f32.mrb[0].mxu0
        %v2092 = vadd.f32 %v2051, %v2091
        %v2093 = vpop.f32.mrb[0].mxu0
        %v2094 = vadd.f32 %v2053, %v2093
        %v2095 = vpop.f32.mrb[0].mxu0
        %v2096 = vpop.f32.mrb[0].mxu0
        %2097 = vdwg.mxu0
        %2098 = vmatprep.subr.bf16.mxu0 %v1569
        %2099 = vmatpush1.bf16.msra.mxu0 %v1568
        %2100 = vmatprep.subr.bf16.mxu0 %v1571
        %2101 = vmatpush1.bf16.msra.mxu0 %v1570
        %2102 = vmatprep.subr.bf16.mxu0 %v1573
        %2103 = vmatpush1.bf16.msra.mxu0 %v1572
        %2104 = vmatprep.subr.bf16.mxu0 %v1575
        %2105 = vmatpush1.bf16.msra.mxu0 %v1574
        %2106 = vmatprep.subr.bf16.mxu0 %v1577
        %2107 = vmatpush1.bf16.msra.mxu0 %v1576
        %2108 = vmatprep.subr.bf16.mxu0 %v1579
        %2109 = vmatpush1.bf16.msra.mxu0 %v1578
        %2110 = vmatprep.subr.bf16.mxu0 %v1581
        %2111 = vmatpush1.bf16.msra.mxu0 %v1580
        %2112 = vmatprep.subr.bf16.mxu0 %v1583
        %2113 = vmatpush1.bf16.msra.mxu0 %v1582
        %2114 = vmatprep.subr.bf16.mxu0 %v1585
        %2115 = vmatpush1.bf16.msra.mxu0 %v1584
        %2116 = vmatprep.subr.bf16.mxu0 %v1587
        %2117 = vmatpush1.bf16.msra.mxu0 %v1586
        %2118 = vmatprep.subr.bf16.mxu0 %v1589
        %2119 = vmatpush1.bf16.msra.mxu0 %v1588
        %2120 = vmatprep.subr.bf16.mxu0 %v1591
        %2121 = vmatpush1.bf16.msra.mxu0 %v1590
        %2122 = vmatprep.subr.bf16.mxu0 %v1593
        %2123 = vmatpush1.bf16.msra.mxu0 %v1592
        %2124 = vmatprep.subr.bf16.mxu0 %v1595
        %2125 = vmatpush1.bf16.msra.mxu0 %v1594
        %2126 = vmatprep.subr.bf16.mxu0 %v1597
        %2127 = vmatpush1.bf16.msra.mxu0 %v1596
        %2128 = vmatprep.subr.bf16.mxu0 %v1599
        %2129 = vmatpush1.bf16.msra.mxu0 %v1598
        %2130 = vmatprep.mubr.bf16.mxu0 %v725
        %2131 = vmatmul.mubr.bf16.gmra.mrb[0].mxu0 %v724
        %v2132 = vpop.f32.mrb[0].mxu0
        %v2133 = vadd.f32 %v2092, %v2132
        %v2134 = vpop.f32.mrb[0].mxu0
        %v2135 = vadd.f32 %v2094, %v2134
        %v2136 = vpop.f32.mrb[0].mxu0
        %v2137 = vpop.f32.mrb[0].mxu0
        %2138 = vdwg.mxu0
        %2139 = vmatprep.subr.bf16.mxu0 %v1601
        %2140 = vmatpush1.bf16.msra.mxu0 %v1600
        %2141 = vmatprep.subr.bf16.mxu0 %v1603
        %2142 = vmatpush1.bf16.msra.mxu0 %v1602
        %2143 = vmatprep.subr.bf16.mxu0 %v1605
        %2144 = vmatpush1.bf16.msra.mxu0 %v1604
        %2145 = vmatprep.subr.bf16.mxu0 %v1607
        %2146 = vmatpush1.bf16.msra.mxu0 %v1606
        %2147 = vmatprep.subr.bf16.mxu0 %v1609
        %2148 = vmatpush1.bf16.msra.mxu0 %v1608
        %2149 = vmatprep.subr.bf16.mxu0 %v1611
        %2150 = vmatpush1.bf16.msra.mxu0 %v1610
        %2151 = vmatprep.subr.bf16.mxu0 %v1613
        %2152 = vmatpush1.bf16.msra.mxu0 %v1612
        %2153 = vmatprep.subr.bf16.mxu0 %v1615
        %2154 = vmatpush1.bf16.msra.mxu0 %v1614
        %2155 = vmatprep.subr.bf16.mxu0 %v1617
        %2156 = vmatpush1.bf16.msra.mxu0 %v1616
        %2157 = vmatprep.subr.bf16.mxu0 %v1619
        %2158 = vmatpush1.bf16.msra.mxu0 %v1618
        %2159 = vmatprep.subr.bf16.mxu0 %v1621
        %2160 = vmatpush1.bf16.msra.mxu0 %v1620
        %2161 = vmatprep.subr.bf16.mxu0 %v1623
        %2162 = vmatpush1.bf16.msra.mxu0 %v1622
        %2163 = vmatprep.subr.bf16.mxu0 %v1625
        %2164 = vmatpush1.bf16.msra.mxu0 %v1624
        %2165 = vmatprep.subr.bf16.mxu0 %v1627
        %2166 = vmatpush1.bf16.msra.mxu0 %v1626
        %2167 = vmatprep.subr.bf16.mxu0 %v1629
        %2168 = vmatpush1.bf16.msra.mxu0 %v1628
        %2169 = vmatprep.subr.bf16.mxu0 %v1631
        %2170 = vmatpush1.bf16.msra.mxu0 %v1630
        %2171 = vmatprep.mubr.bf16.mxu0 %v727
        %2172 = vmatmul.mubr.bf16.gmra.mrb[0].mxu0 %v726
        %v2173 = vpop.f32.mrb[0].mxu0
        %v2174 = vadd.f32 %v2133, %v2173
        %v2175 = vpop.f32.mrb[0].mxu0
        %v2176 = vadd.f32 %v2135, %v2175
        %v2177 = vpop.f32.mrb[0].mxu0
        %v2178 = vpop.f32.mrb[0].mxu0
        %2179 = vdwg.mxu0
        %2180 = vmatprep.subr.bf16.mxu0 %v1633
        %2181 = vmatpush1.bf16.msra.mxu0 %v1632
        %2182 = vmatprep.subr.bf16.mxu0 %v1635
        %2183 = vmatpush1.bf16.msra.mxu0 %v1634
        %2184 = vmatprep.subr.bf16.mxu0 %v1637
        %2185 = vmatpush1.bf16.msra.mxu0 %v1636
        %2186 = vmatprep.subr.bf16.mxu0 %v1639
        %2187 = vmatpush1.bf16.msra.mxu0 %v1638
        %2188 = vmatprep.subr.bf16.mxu0 %v1641
        %2189 = vmatpush1.bf16.msra.mxu0 %v1640
        %2190 = vmatprep.subr.bf16.mxu0 %v1643
        %2191 = vmatpush1.bf16.msra.mxu0 %v1642
        %2192 = vmatprep.subr.bf16.mxu0 %v1645
        %2193 = vmatpush1.bf16.msra.mxu0 %v1644
        %2194 = vmatprep.subr.bf16.mxu0 %v1647
        %2195 = vmatpush1.bf16.msra.mxu0 %v1646
        %2196 = vmatprep.subr.bf16.mxu0 %v1649
        %2197 = vmatpush1.bf16.msra.mxu0 %v1648
        %2198 = vmatprep.subr.bf16.mxu0 %v1651
        %2199 = vmatpush1.bf16.msra.mxu0 %v1650
        %2200 = vmatprep.subr.bf16.mxu0 %v1653
        %2201 = vmatpush1.bf16.msra.mxu0 %v1652
        %2202 = vmatprep.subr.bf16.mxu0 %v1655
        %2203 = vmatpush1.bf16.msra.mxu0 %v1654
        %2204 = vmatprep.subr.bf16.mxu0 %v1657
        %2205 = vmatpush1.bf16.msra.mxu0 %v1656
        %2206 = vmatprep.subr.bf16.mxu0 %v1659
        %2207 = vmatpush1.bf16.msra.mxu0 %v1658
        %2208 = vmatprep.subr.bf16.mxu0 %v1661
        %2209 = vmatpush1.bf16.msra.mxu0 %v1660
        %2210 = vmatprep.subr.bf16.mxu0 %v1663
        %2211 = vmatpush1.bf16.msra.mxu0 %v1662
        %2212 = vmatprep.mubr.bf16.mxu0 %v729
        %2213 = vmatmul.mubr.bf16.gmra.mrb[0].mxu0 %v728
        %v2214 = vpop.f32.mrb[0].mxu0
        %v2215 = vadd.f32 %v2174, %v2214
        %v2216 = vpop.f32.mrb[0].mxu0
        %v2217 = vadd.f32 %v2176, %v2216
        %v2218 = vpop.f32.mrb[0].mxu0
        %v2219 = vpop.f32.mrb[0].mxu0
        %2220 = vdwg.mxu0
        %2221 = vmatprep.subr.bf16.mxu0 %v1665
        %2222 = vmatpush1.bf16.msra.mxu0 %v1664
        %2223 = vmatprep.subr.bf16.mxu0 %v1667
        %2224 = vmatpush1.bf16.msra.mxu0 %v1666
        %2225 = vmatprep.subr.bf16.mxu0 %v1669
        %2226 = vmatpush1.bf16.msra.mxu0 %v1668
        %2227 = vmatprep.subr.bf16.mxu0 %v1671
        %2228 = vmatpush1.bf16.msra.mxu0 %v1670
        %2229 = vmatprep.subr.bf16.mxu0 %v1673
        %2230 = vmatpush1.bf16.msra.mxu0 %v1672
        %2231 = vmatprep.subr.bf16.mxu0 %v1675
        %2232 = vmatpush1.bf16.msra.mxu0 %v1674
        %2233 = vmatprep.subr.bf16.mxu0 %v1677
        %2234 = vmatpush1.bf16.msra.mxu0 %v1676
        %2235 = vmatprep.subr.bf16.mxu0 %v1679
        %2236 = vmatpush1.bf16.msra.mxu0 %v1678
        %2237 = vmatprep.subr.bf16.mxu0 %v1681
        %2238 = vmatpush1.bf16.msra.mxu0 %v1680
        %2239 = vmatprep.subr.bf16.mxu0 %v1683
        %2240 = vmatpush1.bf16.msra.mxu0 %v1682
        %2241 = vmatprep.subr.bf16.mxu0 %v1685
        %2242 = vmatpush1.bf16.msra.mxu0 %v1684
        %2243 = vmatprep.subr.bf16.mxu0 %v1687
        %2244 = vmatpush1.bf16.msra.mxu0 %v1686
        %2245 = vmatprep.subr.bf16.mxu0 %v1689
        %2246 = vmatpush1.bf16.msra.mxu0 %v1688
        %2247 = vmatprep.subr.bf16.mxu0 %v1691
        %2248 = vmatpush1.bf16.msra.mxu0 %v1690
        %2249 = vmatprep.subr.bf16.mxu0 %v1693
        %2250 = vmatpush1.bf16.msra.mxu0 %v1692
        %2251 = vmatprep.subr.bf16.mxu0 %v1695
        %2252 = vmatpush1.bf16.msra.mxu0 %v1694
        %2253 = vmatprep.mubr.bf16.mxu0 %v731
        %2254 = vmatmul.mubr.bf16.gmra.mrb[0].mxu0 %v730
        %v2255 = vpop.f32.mrb[0].mxu0
        %v2256 = vadd.f32 %v2215, %v2255
        %v2257 = vpop.f32.mrb[0].mxu0
        %v2258 = vadd.f32 %v2217, %v2257
        %v2259 = vpop.f32.mrb[0].mxu0
        %v2260 = vpop.f32.mrb[0].mxu0
        %2261 = vdwg.mxu0
        %2262 = vmatprep.subr.bf16.mxu0 %v1697
        %2263 = vmatpush1.bf16.msra.mxu0 %v1696
        %2264 = vmatprep.subr.bf16.mxu0 %v1699
        %2265 = vmatpush1.bf16.msra.mxu0 %v1698
        %2266 = vmatprep.subr.bf16.mxu0 %v1701
        %2267 = vmatpush1.bf16.msra.mxu0 %v1700
        %2268 = vmatprep.subr.bf16.mxu0 %v1703
        %2269 = vmatpush1.bf16.msra.mxu0 %v1702
        %2270 = vmatprep.subr.bf16.mxu0 %v1705
        %2271 = vmatpush1.bf16.msra.mxu0 %v1704
        %2272 = vmatprep.subr.bf16.mxu0 %v1707
        %2273 = vmatpush1.bf16.msra.mxu0 %v1706
        %2274 = vmatprep.subr.bf16.mxu0 %v1709
        %2275 = vmatpush1.bf16.msra.mxu0 %v1708
        %2276 = vmatprep.subr.bf16.mxu0 %v1711
        %2277 = vmatpush1.bf16.msra.mxu0 %v1710
        %2278 = vmatprep.subr.bf16.mxu0 %v1713
        %2279 = vmatpush1.bf16.msra.mxu0 %v1712
        %2280 = vmatprep.subr.bf16.mxu0 %v1715
        %2281 = vmatpush1.bf16.msra.mxu0 %v1714
        %2282 = vmatprep.subr.bf16.mxu0 %v1717
        %2283 = vmatpush1.bf16.msra.mxu0 %v1716
        %2284 = vmatprep.subr.bf16.mxu0 %v1719
        %2285 = vmatpush1.bf16.msra.mxu0 %v1718
        %2286 = vmatprep.subr.bf16.mxu0 %v1721
        %2287 = vmatpush1.bf16.msra.mxu0 %v1720
        %2288 = vmatprep.subr.bf16.mxu0 %v1723
        %2289 = vmatpush1.bf16.msra.mxu0 %v1722
        %2290 = vmatprep.subr.bf16.mxu0 %v1725
        %2291 = vmatpush1.bf16.msra.mxu0 %v1724
        %2292 = vmatprep.subr.bf16.mxu0 %v1727
        %2293 = vmatpush1.bf16.msra.mxu0 %v1726
        %2294 = vmatprep.mubr.bf16.mxu0 %v733
        %2295 = vmatmul.mubr.bf16.gmra.mrb[0].mxu0 %v732
        %v2296 = vpop.f32.mrb[0].mxu0
        %v2297 = vadd.f32 %v2256, %v2296
        %v2298 = vpop.f32.mrb[0].mxu0
        %v2299 = vadd.f32 %v2258, %v2298
        %v2300 = vpop.f32.mrb[0].mxu0
        %v2301 = vpop.f32.mrb[0].mxu0
        %2302 = vdwg.mxu0
        %2303 = vmatprep.subr.bf16.mxu0 %v1729
        %2304 = vmatpush1.bf16.msra.mxu0 %v1728
        %2305 = vmatprep.subr.bf16.mxu0 %v1731
        %2306 = vmatpush1.bf16.msra.mxu0 %v1730
        %2307 = vmatprep.subr.bf16.mxu0 %v1733
        %2308 = vmatpush1.bf16.msra.mxu0 %v1732
        %2309 = vmatprep.subr.bf16.mxu0 %v1735
        %2310 = vmatpush1.bf16.msra.mxu0 %v1734
        %2311 = vmatprep.subr.bf16.mxu0 %v1737
        %2312 = vmatpush1.bf16.msra.mxu0 %v1736
        %2313 = vmatprep.subr.bf16.mxu0 %v1739
        %2314 = vmatpush1.bf16.msra.mxu0 %v1738
        %2315 = vmatprep.subr.bf16.mxu0 %v1741
        %2316 = vmatpush1.bf16.msra.mxu0 %v1740
        %2317 = vmatprep.subr.bf16.mxu0 %v1743
        %2318 = vmatpush1.bf16.msra.mxu0 %v1742
        %2319 = vmatprep.subr.bf16.mxu0 %v1745
        %2320 = vmatpush1.bf16.msra.mxu0 %v1744
        %2321 = vmatprep.subr.bf16.mxu0 %v1747
        %2322 = vmatpush1.bf16.msra.mxu0 %v1746
        %2323 = vmatprep.subr.bf16.mxu0 %v1749
        %2324 = vmatpush1.bf16.msra.mxu0 %v1748
        %2325 = vmatprep.subr.bf16.mxu0 %v1751
        %2326 = vmatpush1.bf16.msra.mxu0 %v1750
        %2327 = vmatprep.subr.bf16.mxu0 %v1753
        %2328 = vmatpush1.bf16.msra.mxu0 %v1752
        %2329 = vmatprep.subr.bf16.mxu0 %v1755
        %2330 = vmatpush1.bf16.msra.mxu0 %v1754
        %2331 = vmatprep.subr.bf16.mxu0 %v1757
        %2332 = vmatpush1.bf16.msra.mxu0 %v1756
        %2333 = vmatprep.subr.bf16.mxu0 %v1759
        %2334 = vmatpush1.bf16.msra.mxu0 %v1758
        %2335 = vmatprep.mubr.bf16.mxu0 %v735
        %2336 = vmatmul.mubr.bf16.gmra.mrb[0].mxu0 %v734
        %v2337 = vpop.f32.mrb[0].mxu0
        %v2338 = vadd.f32 %v2297, %v2337
        %v2339 = vpop.f32.mrb[0].mxu0
        %v2340 = vadd.f32 %v2299, %v2339
        %v2341 = vpop.f32.mrb[0].mxu0
        %v2342 = vpop.f32.mrb[0].mxu0
        %2343 = vdwg.mxu0
        %v2346 = vcombine.low %v2338, %v2340
        %v2348 = vunpack.c.l.s4 1966171168
        %v2349 = vunpack.c.0.s8 %v2348
        %v2350 = vlaneseq
        %v2351 = vshrl.u32 %v2350, 7
        %v2352 = vsub.s32 %v2349, %v2351
        %v2353 = vrot.slane %v2346, %v2352
        %v2355 = vunpack.c.l.s4 1966171168
        %v2356 = vunpack.c.0.s8 %v2355
        %v2357 = vlaneseq
        %v2358 = vshrl.u32 %v2357, 7
        %v2359 = vsub.s32 %v2356, %v2358
        %v2360 = vrot.slane %v2353, %v2359
        %v2362 = vadd.f32 %v719, %v2360
        %v2363 = vlaneseq
        %vm2364 = vcmp.ge.s32.totalorder %v2363, 0
        %vm2365 = vcmp.lt.s32.totalorder %v2363, 256
        %vm2366 = vmand %vm2364, %vm2365
        %2367 = vst.msk [vmem:[#allocation2] sm:$0x3] %vm2366, %v2362
        // Predicated region
        $region57: #{tpu_custom_call.1} parent=39 // pred_check
          %p2368 = pneg %p288
        $region58: #{tpu_custom_call.1} parent=39 // pred_check_branch
          %2370 = sbr.rel (%p2368) target = $region60
        $region59: #{tpu_custom_call.1} parent=39 // pred_region
          %v2371 = vld [vmem:[#allocation2] sm:$0x3]
          %v2372 = vmul.f32 %v2371, 0.0625
          %v2373 = vld [vmem:[%s2] sm:$0x3]
          %v2374 = vadd.f32 %v2372, %v2373
          %v2375 = vld [vmem:[#allocation8] sm:$0xff]
          %v2376 = vld [vmem:[#allocation8 + $0x8] sm:$0xff]
          %v2377 = vld [vmem:[#allocation8 + $0x10] sm:$0xff]
          %v2378 = vld [vmem:[#allocation8 + $0x18] sm:$0xff]
          %v2379 = vld [vmem:[#allocation8 + $0x20] sm:$0xff]
          %v2380 = vld [vmem:[#allocation8 + $0x28] sm:$0xff]
          %v2381 = vld [vmem:[#allocation8 + $0x30] sm:$0xff]
          %v2382 = vld [vmem:[#allocation8 + $0x38] sm:$0xff]
          %v2383 = vld [vmem:[#allocation8 + $0x40] sm:$0xff]
          %v2384 = vld [vmem:[#allocation8 + $0x48] sm:$0xff]
          %v2385 = vld [vmem:[#allocation8 + $0x50] sm:$0xff]
          %v2386 = vld [vmem:[#allocation8 + $0x58] sm:$0xff]
          %v2387 = vld [vmem:[#allocation8 + $0x60] sm:$0xff]
          %v2388 = vld [vmem:[#allocation8 + $0x68] sm:$0xff]
          %v2389 = vld [vmem:[#allocation8 + $0x70] sm:$0xff]
          %v2390 = vld [vmem:[#allocation8 + $0x78] sm:$0xff]
          %v2391 = vld [vmem:[#allocation8 + $0x80] sm:$0xff]
          %v2392 = vld [vmem:[#allocation8 + $0x88] sm:$0xff]
          %v2393 = vld [vmem:[#allocation8 + $0x90] sm:$0xff]
          %v2394 = vld [vmem:[#allocation8 + $0x98] sm:$0xff]
          %v2395 = vld [vmem:[#allocation8 + $0xa0] sm:$0xff]
          %v2396 = vld [vmem:[#allocation8 + $0xa8] sm:$0xff]
          %v2397 = vld [vmem:[#allocation8 + $0xb0] sm:$0xff]
          %v2398 = vld [vmem:[#allocation8 + $0xb8] sm:$0xff]
          %v2399 = vld [vmem:[#allocation8 + $0xc0] sm:$0xff]
          %v2400 = vld [vmem:[#allocation8 + $0xc8] sm:$0xff]
          %v2401 = vld [vmem:[#allocation8 + $0xd0] sm:$0xff]
          %v2402 = vld [vmem:[#allocation8 + $0xd8] sm:$0xff]
          %v2403 = vld [vmem:[#allocation8 + $0xe0] sm:$0xff]
          %v2404 = vld [vmem:[#allocation8 + $0xe8] sm:$0xff]
          %v2405 = vld [vmem:[#allocation8 + $0xf0] sm:$0xff]
          %v2406 = vld [vmem:[#allocation8 + $0xf8] sm:$0xff]
          %v2407 = vld [vmem:[%s4] sm:$0x1]
          %v2409 = vlaneseq
          %v2410 = vshrl.u32 %v2409, 7
          %v2411 = vsub.s32 0, %v2410
          %v2412 = vrot.slane %v2374, %v2411
          %v2413 = vlaneseq
          %v2414 = vshrl.u32 %v2413, 7
          %v2415 = vsub.s32 1, %v2414
          %v2416 = vrot.slane %v2374, %v2415
          %2419 = vmatprep.subr.mxu0 0.0
          %2420 = vmatpush1.msra.mxu0 %v2375
          %2421 = vmatprep.subr.mxu0 0.0
          %2422 = vmatpush1.msra.mxu0 %v2376
          %2423 = vmatprep.subr.mxu0 0.0
          %2424 = vmatpush1.msra.mxu0 %v2377
          %2425 = vmatprep.subr.mxu0 0.0
          %2426 = vmatpush1.msra.mxu0 %v2378
          %2427 = vmatprep.subr.mxu0 0.0
          %2428 = vmatpush1.msra.mxu0 %v2379
          %2429 = vmatprep.subr.mxu0 0.0
          %2430 = vmatpush1.msra.mxu0 %v2380
          %2431 = vmatprep.subr.mxu0 0.0
          %2432 = vmatpush1.msra.mxu0 %v2381
          %2433 = vmatprep.subr.mxu0 0.0
          %2434 = vmatpush1.msra.mxu0 %v2382
          %2435 = vmatprep.subr.mxu0 0.0
          %2436 = vmatpush1.msra.mxu0 %v2383
          %2437 = vmatprep.subr.mxu0 0.0
          %2438 = vmatpush1.msra.mxu0 %v2384
          %2439 = vmatprep.subr.mxu0 0.0
          %2440 = vmatpush1.msra.mxu0 %v2385
          %2441 = vmatprep.subr.mxu0 0.0
          %2442 = vmatpush1.msra.mxu0 %v2386
          %2443 = vmatprep.subr.mxu0 0.0
          %2444 = vmatpush1.msra.mxu0 %v2387
          %2445 = vmatprep.subr.mxu0 0.0
          %2446 = vmatpush1.msra.mxu0 %v2388
          %2447 = vmatprep.subr.mxu0 0.0
          %2448 = vmatpush1.msra.mxu0 %v2389
          %2449 = vmatprep.subr.mxu0 0.0
          %2450 = vmatpush1.msra.mxu0 %v2390
          %2451 = vmatprep.subr.mxu0 0.0
          %2452 = vmatpush1.msra.mxu0 %v2391
          %2453 = vmatprep.subr.mxu0 0.0
          %2454 = vmatpush1.msra.mxu0 %v2392
          %2455 = vmatprep.subr.mxu0 0.0
          %2456 = vmatpush1.msra.mxu0 %v2393
          %2457 = vmatprep.subr.mxu0 0.0
          %2458 = vmatpush1.msra.mxu0 %v2394
          %2459 = vmatprep.subr.mxu0 0.0
          %2460 = vmatpush1.msra.mxu0 %v2395
          %2461 = vmatprep.subr.mxu0 0.0
          %2462 = vmatpush1.msra.mxu0 %v2396
          %2463 = vmatprep.subr.mxu0 0.0
          %2464 = vmatpush1.msra.mxu0 %v2397
          %2465 = vmatprep.subr.mxu0 0.0
          %2466 = vmatpush1.msra.mxu0 %v2398
          %2467 = vmatprep.subr.mxu0 0.0
          %2468 = vmatpush1.msra.mxu0 %v2399
          %2469 = vmatprep.subr.mxu0 0.0
          %2470 = vmatpush1.msra.mxu0 %v2400
          %2471 = vmatprep.subr.mxu0 0.0
          %2472 = vmatpush1.msra.mxu0 %v2401
          %2473 = vmatprep.subr.mxu0 0.0
          %2474 = vmatpush1.msra.mxu0 %v2402
          %2475 = vmatprep.subr.mxu0 0.0
          %2476 = vmatpush1.msra.mxu0 %v2403
          %2477 = vmatprep.subr.mxu0 0.0
          %2478 = vmatpush1.msra.mxu0 %v2404
          %2479 = vmatprep.subr.mxu0 0.0
          %2480 = vmatpush1.msra.mxu0 %v2405
          %2481 = vmatprep.subr.mxu0 0.0
          %2482 = vmatpush1.msra.mxu0 %v2406
          %2483 = vmatprep.mubr.f32.mxu0 %v2416
          %2484 = vmatmul.mubr.f32.gmra.mrb[0].mxu0 %v2412
          %v2485 = vpop.f32.mrb[0].mxu0
          %v2486 = vadd.f32 %v2407, %v2485
          %v2487 = vpop.f32.mrb[0].mxu0
          %2488 = vdwg.mxu0
          %2489 = vst [vmem:[%s286] sm:$0x1] %v2486
        $region60: #{tpu_custom_call.1} parent=39 // pred_fallthru
          _
        %s2490 = sand.u32 %s155, 1
        %s2491 = scalar_lea.sflag [#allocation5], %s2490
        %s2492 = sand.u32 %s155, 1
        %s2493 = scalar_lea.vmem [#allocation9], %s2492
        // Predicated region
        $region61: #{tpu_custom_call.1} parent=39 // pred_check
          %p2494 = pneg %p165
        $region62: #{tpu_custom_call.1} parent=39 // pred_check_branch
          %2496 = sbr.rel (%p2494) target = $region64
        $region63: #{tpu_custom_call.1} parent=39 // pred_region
          %s2498 = ssub.s32 16, 16
          %2499 = vsyncadd %s2491, %s2498
          %s2500 = smul.addr %s27, 16
          %s2501 = scalar_lea.hbm %s5, %s2500
          %s2503 = sshll.u32 %s2493, 4
          %s2504 = int_to_ptr.vmem [resolvable:$true] %s2503
          %2506 = dma.vmem_to_hbm [thread:$0]  %s2504, 16, %s2501, %s2491
        $region64: #{tpu_custom_call.1} parent=39 // pred_fallthru
          _
      $region40: #{tpu_custom_call.1} parent=5 // pred_fallthru
        _
      %p2507 = scmp.le.s32.totalorder 2, %s18
      // Predicated region
      $region65: #{tpu_custom_call.1} parent=5 // pred_check
        %p2508 = pneg %p2507
      $region66: #{tpu_custom_call.1} parent=5 // pred_check_branch
        %2510 = sbr.rel (%p2508) target = $region68
      $region67: #{tpu_custom_call.1} parent=5 // pred_region
        %s2511 = ssub.s32 %s18, 2
        // Predicated region
        $region69: #{tpu_custom_call.1} parent=67 // pred_check
          %p2512 = pneg %p171
        $region70: #{tpu_custom_call.1} parent=67 // pred_check_branch
          %2514 = sbr.rel (%p2512) target = $region72
        $region71: #{tpu_custom_call.1} parent=67 // pred_region
          %s2515 = sand.u32 %s156, 1
          %s2516 = scalar_lea.sflag [#allocation5], %s2515
          %s2517 = sand.u32 %s156, 1
          %s2518 = scalar_lea.vmem [#allocation9], %s2517
          %2519 = dma.done %s2516, 16
        $region72: #{tpu_custom_call.1} parent=67 // pred_fallthru
          _
      $region68: #{tpu_custom_call.1} parent=5 // pred_fallthru
        _
    $region6: #{tpu_custom_call.1} parent=1 // loop_footer
      %s22 = sadd.s32 1, %s18
    $region7: #{tpu_custom_call.1} parent=1 // loop_footer_branch
      %17 = sbr.rel target = $region3
    $region8: #{tpu_custom_call.1} parent=1 // loop_exit
      _
    %2520 = vsyncpa [#allocation4], 1
    %s2521 = scalar_lea.sflag [#allocation4], 1
    %2522 = vsyncpa %s2521, 1
    %2523 = vsyncpa [#allocation7], 1
    %2524 = vsyncpa [#allocation5], 1
    %s2525 = scalar_lea.sflag [#allocation5], 1
    %2526 = vsyncpa %s2525, 1

</llo_original>
